<compile_context>
chip_gen: v5e
topology: v5e:2x2
jax: 0.10.0
libtpu: 0.0.40
codegen_flags: <defaults>
</compile_context>

<pallas_src>
import functools

import jax
import jax.numpy as jnp
from jax.experimental import pallas as pl
from jax.experimental.pallas import tpu as pltpu

HIDDEN = 512
LANE = 128


def _pick_tile(n, cap):
    """Largest divisor of n that is <= cap and a multiple of 8, else n itself."""
    if n <= cap:
        return n
    for d in range(min(n, cap), 7, -1):
        if n % d == 0 and d % 8 == 0:
            return d
    return n


def _pad_last(a, target):
    pad = target - a.shape[-1]
    if pad == 0:
        return a
    return jnp.pad(a, [(0, 0)] * (a.ndim - 1) + [(0, pad)])


def _pad_rows(a, target):
    pad = target - a.shape[0]
    if pad == 0:
        return a
    return jnp.pad(a, [(0, pad)] + [(0, 0)] * (a.ndim - 1))


def pairwise_embedding_kernel(
    x_i_ref,                 # (TI, Cp)  f32   rows of x for the i side
    x_j_ref,                 # (TJ, Cp)  f32   rows of x for the j side (pi_encoder)
    wp1_ref, bp1_ref,        # (Cp, H) bf16, (1, H) f32     pi_encoder layer 1
    wp2ab_ref, bp2ab_ref,    # (H, 2Cp) bf16, (1, 2Cp) f32  pi_encoder layer 2 (a|b fused)
    wn1_ref, bn1_ref,        # (Cp, H) bf16, (1, H) f32     ni_encoder layer 1
    wn2_ref, bn2_ref,        # (H, Cp) bf16, (1, Cp) f32    ni_encoder layer 2
    o_ref,                   # (TI, Cp) f32
    acc_ref,                 # (TI, H)  f32 scratch accumulator
    *, n_total,
):
    j = pl.program_id(2)
    ti, cp = x_i_ref.shape
    tj = x_j_ref.shape[0]
    h = wn1_ref.shape[1]

    # ---- pi_encoder on the j-chunk rows: one fused (H, 2Cp) matmul ----
    xj = x_j_ref[...]
    hp = jnp.maximum(
        jnp.dot(xj.astype(jnp.bfloat16), wp1_ref[...],
                preferred_element_type=jnp.float32) + bp1_ref[...], 0.0)       # (tj, H)
    ab = jnp.dot(hp.astype(jnp.bfloat16), wp2ab_ref[...],
                 preferred_element_type=jnp.float32) + bp2ab_ref[...]           # (tj, 2Cp)
    a = ab[:, :cp]                                                              # gate  (pi_code[...,0])
    b = ab[:, cp:]                                                              # shift (pi_code[...,1])

    # Fold "+ b" into the post-matmul bias:  (x*a + b) @ wn1 + bn1
    #                                      == (x*a) @ wn1 + (b @ wn1 + bn1)
    bterm = jnp.dot(b.astype(jnp.bfloat16), wn1_ref[...],
                    preferred_element_type=jnp.float32) + bn1_ref[...]          # (tj, H)

    # ---- pairwise combine + first ni_encoder layer for this (i-tile, j-chunk) ----
    prod = x_i_ref[...][:, None, :] * a[None, :, :]                             # (ti, tj, cp)
    hc = jnp.dot(prod.reshape(ti * tj, cp).astype(jnp.bfloat16), wn1_ref[...],
                 preferred_element_type=jnp.float32)                            # (ti*tj, H)
    hc = jnp.maximum(hc.reshape(ti, tj, h) + bterm[None, :, :], 0.0)
    h_sum = jnp.sum(hc, axis=1)                                                 # (ti, H)

    @pl.when(j == 0)
    def _():
        acc_ref[...] = jnp.zeros_like(acc_ref)

    acc_ref[...] += h_sum

    # ---- finalize: last Linear commutes with the mean over j ----
    @pl.when(j == pl.num_programs(2) - 1)
    def _():
        mean_h = acc_ref[...] * (1.0 / n_total)                                 # (ti, H)
        o_ref[...] = (jnp.dot(mean_h.astype(jnp.bfloat16), wn2_ref[...],
                              preferred_element_type=jnp.float32)
                      + bn2_ref[...]).astype(o_ref.dtype)


def pairwise_embedding(x, params, *, ti_max=128, tj_max=128,
                       workset_budget_bytes=8 * 1024 * 1024):
    """x: (B, N, C) float32; params: 10 arrays as produced by init_params."""
    wp1, bp1, wp2a, bp2a, wp2b, bp2b, wn1, bn1, wn2, bn2 = params
    B, N, C = x.shape
    H = wp1.shape[1]
    Cp = ((C + LANE - 1) // LANE) * LANE

    # Lane-dense zero padding of the channel dim (math is unchanged) + bf16 weights.
    # In production this weight preprocessing would be done once, not per call.
    xp = _pad_last(x, Cp)
    wp1p = _pad_rows(wp1, Cp).astype(jnp.bfloat16)
    wp2ab = jnp.concatenate([_pad_last(wp2a, Cp), _pad_last(wp2b, Cp)],
                            axis=-1).astype(jnp.bfloat16)
    bp2ab = jnp.concatenate([_pad_last(bp2a, Cp), _pad_last(bp2b, Cp)], axis=-1)
    wn1p = _pad_rows(wn1, Cp).astype(jnp.bfloat16)
    wn2p = _pad_last(wn2, Cp).astype(jnp.bfloat16)
    bn2p = _pad_last(bn2, Cp)

    # Tile sizes: i is a parallel axis; j is the (chunked) reduction axis sized
    # so that the per-step pairwise working set stays in the few-MiB range.
    TI = _pick_tile(N, ti_max)
    per_elem = 6 * Cp + 4 * H           # f32 prod + bf16 copy + f32 h row
    tj_cap = max(8, workset_budget_bytes // max(1, TI * per_elem))
    TJ = _pick_tile(N, min(tj_max, tj_cap))
    NI, NJ = N // TI, N // TJ

    def const_spec(shape):
        return pl.BlockSpec(shape, lambda b, i, j: (0,) * len(shape))

    grid_spec = pltpu.PrefetchScalarGridSpec(
        num_scalar_prefetch=0,
        grid=(B, NI, NJ),
        in_specs=[
            pl.BlockSpec((None, TI, Cp), lambda b, i, j: (b, i, 0)),   # x rows for i
            pl.BlockSpec((None, TJ, Cp), lambda b, i, j: (b, j, 0)),   # x rows for j
            const_spec((Cp, H)), const_spec((1, H)),                   # wp1, bp1
            const_spec((H, 2 * Cp)), const_spec((1, 2 * Cp)),          # wp2ab, bp2ab
            const_spec((Cp, H)), const_spec((1, H)),                   # wn1, bn1
            const_spec((H, Cp)), const_spec((1, Cp)),                  # wn2, bn2
        ],
        out_specs=pl.BlockSpec((None, TI, Cp), lambda b, i, j: (b, i, 0)),
        scratch_shapes=[pltpu.VMEM((TI, H), jnp.float32)],
    )

    out = pl.pallas_call(
        functools.partial(pairwise_embedding_kernel, n_total=N),
        out_shape=jax.ShapeDtypeStruct((B, N, Cp), jnp.float32),
        grid_spec=grid_spec,
        compiler_params=pltpu.CompilerParams(
            dimension_semantics=("parallel", "parallel", "arbitrary"),
            vmem_limit_bytes=48 * 1024 * 1024,
        ),
    )(xp, xp, wp1p, bp1, wp2ab, bp2ab, wn1p, bn1, wn2p, bn2p)

    return out[..., :C]


def init_params(key, C, H=HIDDEN):
    """Deterministic synthetic parameters matching the PyTorch module's shapes."""
    ks = jax.random.split(key, 8)
    s = 0.1
    # pi_encoder: Linear(C, H), Linear(H, 2C)
    wp1 = jax.random.normal(ks[0], (C, H), jnp.float32) * s
    bp1 = jax.random.normal(ks[1], (1, H), jnp.float32) * s
    wp2 = jax.random.normal(ks[2], (H, 2 * C), jnp.float32) * s
    bp2 = jax.random.normal(ks[3], (1, 2 * C), jnp.float32) * s
    # out_shape (C, 2): flat index 2k -> pi_code[..., k, 0], 2k+1 -> pi_code[..., k, 1]
    wp2a, wp2b = wp2[:, 0::2], wp2[:, 1::2]
    bp2a, bp2b = bp2[:, 0::2], bp2[:, 1::2]
    # ni_encoder: Linear(C, H), Linear(H, C)
    wn1 = jax.random.normal(ks[4], (C, H), jnp.float32) * s
    bn1 = jax.random.normal(ks[5], (1, H), jnp.float32) * s
    wn2 = jax.random.normal(ks[6], (H, C), jnp.float32) * s
    bn2 = jax.random.normal(ks[7], (1, C), jnp.float32) * s
    return (wp1, bp1, wp2a, bp2a, wp2b, bp2b, wn1, bn1, wn2, bn2)


def reference(x, params):
    """Plain-JAX f32 forward matching the PyTorch semantics exactly."""
    wp1, bp1, wp2a, bp2a, wp2b, bp2b, wn1, bn1, wn2, bn2 = params
    hp = jnp.maximum(x @ wp1 + bp1, 0.0)
    a = hp @ wp2a + bp2a                      # pi_code[..., 0]
    bc = hp @ wp2b + bp2b                     # pi_code[..., 1]
    y = a[..., None, :, :] * x[..., :, None, :] + bc[..., None, :, :]  # (B, N, N, C)
    h = jnp.maximum(y @ wn1 + bn1, 0.0)
    z = h @ wn2 + bn2
    return z.mean(-2)


if __name__ == "__main__":
    B, N, C = 2, 8, 4
    key = jax.random.PRNGKey(0)
    kx, kp = jax.random.split(key)
    x = jax.random.normal(kx, (B, N, C), jnp.float32)
    params = init_params(kp, C)

    out = jax.block_until_ready(pairwise_embedding(x, params))
    ref = jax.block_until_ready(reference(x, params))

    assert out.shape == (B, N, C), out.shape
    err = float(jnp.max(jnp.abs(out - ref)))
    # bf16 MXU inputs (f32 accumulation) -> loosened tolerance vs. the f32 reference.
    assert jnp.allclose(out, ref, atol=5e-2, rtol=5e-2), ("max abs err", err)
    print("KERNEL_OK")
</pallas_src>

<mosaic_0001>
module attributes {stable_mosaic.version = 11 : i64} {
  func.func @pairwise_embedding_kernel(%arg0: i32, %arg1: i32, %arg2: i32, %arg3: memref<1x8x128xf32, #tpu.memory_space<vmem>>, %arg4: memref<1x8x128xf32, #tpu.memory_space<vmem>>, %arg5: memref<128x512xbf16, #tpu.memory_space<vmem>>, %arg6: memref<1x512xf32, #tpu.memory_space<vmem>>, %arg7: memref<512x256xbf16, #tpu.memory_space<vmem>>, %arg8: memref<1x256xf32, #tpu.memory_space<vmem>>, %arg9: memref<128x512xbf16, #tpu.memory_space<vmem>>, %arg10: memref<1x512xf32, #tpu.memory_space<vmem>>, %arg11: memref<512x128xbf16, #tpu.memory_space<vmem>>, %arg12: memref<1x128xf32, #tpu.memory_space<vmem>>, %arg13: memref<1x8x128xf32, #tpu.memory_space<vmem>>, %arg14: memref<8x512xf32, #tpu.memory_space<vmem>>) attributes {dimension_semantics = [#tpu.dimension_semantics<parallel>, #tpu.dimension_semantics<parallel>, #tpu.dimension_semantics<arbitrary>], iteration_bounds = array<i64: 2, 1, 1>, scalar_prefetch = 0 : i64, scratch_operands = 1 : i64, tpu.core_type = #tpu.core_type<tc>, window_params = [{transform_indices = @transform_0, window_bounds = array<i64: 1, 8, 128>}, {transform_indices = @transform_1, window_bounds = array<i64: 1, 8, 128>}, {pipeline_mode = #tpu.pipeline_mode<synchronous>, transform_indices = @transform_2, window_bounds = array<i64: 128, 512>}, {pipeline_mode = #tpu.pipeline_mode<synchronous>, transform_indices = @transform_3, window_bounds = array<i64: 1, 512>}, {pipeline_mode = #tpu.pipeline_mode<synchronous>, transform_indices = @transform_4, window_bounds = array<i64: 512, 256>}, {pipeline_mode = #tpu.pipeline_mode<synchronous>, transform_indices = @transform_5, window_bounds = array<i64: 1, 256>}, {pipeline_mode = #tpu.pipeline_mode<synchronous>, transform_indices = @transform_6, window_bounds = array<i64: 128, 512>}, {pipeline_mode = #tpu.pipeline_mode<synchronous>, transform_indices = @transform_7, window_bounds = array<i64: 1, 512>}, {pipeline_mode = #tpu.pipeline_mode<synchronous>, transform_indices = @transform_8, window_bounds = array<i64: 512, 128>}, {pipeline_mode = #tpu.pipeline_mode<synchronous>, transform_indices = @transform_9, window_bounds = array<i64: 1, 128>}, {transform_indices = @transform_10, window_bounds = array<i64: 1, 8, 128>}]} {
    %c0 = arith.constant 0 : index
    %c0_0 = arith.constant 0 : index
    %c0_1 = arith.constant 0 : index
    %0 = vector.load %arg4[%c0, %c0_0, %c0_1] : memref<1x8x128xf32, #tpu.memory_space<vmem>>, vector<1x8x128xf32>
    %1 = vector.shape_cast %0 : vector<1x8x128xf32> to vector<8x128xf32>
    %2 = arith.truncf %1 : vector<8x128xf32> to vector<8x128xbf16>
    %c0_2 = arith.constant 0 : index
    %c0_3 = arith.constant 0 : index
    %3 = vector.load %arg5[%c0_2, %c0_3] : memref<128x512xbf16, #tpu.memory_space<vmem>>, vector<128x512xbf16>
    %cst = arith.constant dense<0.000000e+00> : vector<8x512xf32>
    %4 = tpu.matmul %2, %3, %cst {dimension_numbers = #tpu.dot_dimension_numbers<[1], [0], [0], [1], [0, 0, 1, 1], [], []>} : vector<8x128xbf16>, vector<128x512xbf16>, vector<8x512xf32> -> vector<8x512xf32>
    %c0_4 = arith.constant 0 : index
    %c0_5 = arith.constant 0 : index
    %5 = vector.load %arg6[%c0_4, %c0_5] : memref<1x512xf32, #tpu.memory_space<vmem>>, vector<1x512xf32>
    %6 = vector.broadcast %5 : vector<1x512xf32> to vector<8x512xf32>
    %7 = arith.addf %4, %6 : vector<8x512xf32>
    %cst_6 = arith.constant 0.000000e+00 : f32
    %8 = vector.broadcast %cst_6 : f32 to vector<8x512xf32>
    %9 = arith.maximumf %7, %8 : vector<8x512xf32>
    %10 = arith.truncf %9 : vector<8x512xf32> to vector<8x512xbf16>
    %c0_7 = arith.constant 0 : index
    %c0_8 = arith.constant 0 : index
    %11 = vector.load %arg7[%c0_7, %c0_8] : memref<512x256xbf16, #tpu.memory_space<vmem>>, vector<512x256xbf16>
    %cst_9 = arith.constant dense<0.000000e+00> : vector<8x256xf32>
    %12 = tpu.matmul %10, %11, %cst_9 {dimension_numbers = #tpu.dot_dimension_numbers<[1], [0], [0], [1], [0, 0, 1, 1], [], []>} : vector<8x512xbf16>, vector<512x256xbf16>, vector<8x256xf32> -> vector<8x256xf32>
    %c0_10 = arith.constant 0 : index
    %c0_11 = arith.constant 0 : index
    %13 = vector.load %arg8[%c0_10, %c0_11] : memref<1x256xf32, #tpu.memory_space<vmem>>, vector<1x256xf32>
    %14 = vector.broadcast %13 : vector<1x256xf32> to vector<8x256xf32>
    %15 = arith.addf %12, %14 : vector<8x256xf32>
    %16 = vector.extract_strided_slice %15 {offsets = [0, 0], sizes = [8, 128], strides = [1, 1]} : vector<8x256xf32> to vector<8x128xf32>
    %17 = vector.extract_strided_slice %15 {offsets = [0, 128], sizes = [8, 128], strides = [1, 1]} : vector<8x256xf32> to vector<8x128xf32>
    %18 = arith.truncf %17 : vector<8x128xf32> to vector<8x128xbf16>
    %c0_12 = arith.constant 0 : index
    %c0_13 = arith.constant 0 : index
    %19 = vector.load %arg9[%c0_12, %c0_13] : memref<128x512xbf16, #tpu.memory_space<vmem>>, vector<128x512xbf16>
    %cst_14 = arith.constant dense<0.000000e+00> : vector<8x512xf32>
    %20 = tpu.matmul %18, %19, %cst_14 {dimension_numbers = #tpu.dot_dimension_numbers<[1], [0], [0], [1], [0, 0, 1, 1], [], []>} : vector<8x128xbf16>, vector<128x512xbf16>, vector<8x512xf32> -> vector<8x512xf32>
    %c0_15 = arith.constant 0 : index
    %c0_16 = arith.constant 0 : index
    %21 = vector.load %arg10[%c0_15, %c0_16] : memref<1x512xf32, #tpu.memory_space<vmem>>, vector<1x512xf32>
    %22 = vector.broadcast %21 : vector<1x512xf32> to vector<8x512xf32>
    %23 = arith.addf %20, %22 : vector<8x512xf32>
    %c0_17 = arith.constant 0 : index
    %c0_18 = arith.constant 0 : index
    %c0_19 = arith.constant 0 : index
    %24 = vector.load %arg3[%c0_17, %c0_18, %c0_19] : memref<1x8x128xf32, #tpu.memory_space<vmem>>, vector<1x8x128xf32>
    %25 = vector.shape_cast %24 : vector<1x8x128xf32> to vector<8x128xf32>
    %26 = vector.shape_cast %25 : vector<8x128xf32> to vector<8x1x128xf32>
    %27 = vector.shape_cast %16 : vector<8x128xf32> to vector<1x8x128xf32>
    %28 = vector.broadcast %26 : vector<8x1x128xf32> to vector<8x8x128xf32>
    %29 = vector.broadcast %27 : vector<1x8x128xf32> to vector<8x8x128xf32>
    %30 = arith.mulf %28, %29 : vector<8x8x128xf32>
    %31 = vector.shape_cast %30 : vector<8x8x128xf32> to vector<64x128xf32>
    %32 = arith.truncf %31 : vector<64x128xf32> to vector<64x128xbf16>
    %c0_20 = arith.constant 0 : index
    %c0_21 = arith.constant 0 : index
    %33 = vector.load %arg9[%c0_20, %c0_21] : memref<128x512xbf16, #tpu.memory_space<vmem>>, vector<128x512xbf16>
    %cst_22 = arith.constant dense<0.000000e+00> : vector<64x512xf32>
    %34 = tpu.matmul %32, %33, %cst_22 {dimension_numbers = #tpu.dot_dimension_numbers<[1], [0], [0], [1], [0, 0, 1, 1], [], []>} : vector<64x128xbf16>, vector<128x512xbf16>, vector<64x512xf32> -> vector<64x512xf32>
    %35 = vector.shape_cast %34 : vector<64x512xf32> to vector<8x8x512xf32>
    %36 = vector.shape_cast %23 : vector<8x512xf32> to vector<1x8x512xf32>
    %37 = vector.broadcast %36 : vector<1x8x512xf32> to vector<8x8x512xf32>
    %38 = arith.addf %35, %37 : vector<8x8x512xf32>
    %cst_23 = arith.constant 0.000000e+00 : f32
    %39 = vector.broadcast %cst_23 : f32 to vector<8x8x512xf32>
    %40 = arith.maximumf %38, %39 : vector<8x8x512xf32>
    %cst_24 = arith.constant dense<0.000000e+00> : vector<8x512xf32>
    %41 = vector.multi_reduction <add>, %40, %cst_24 [1] : vector<8x8x512xf32> to vector<8x512xf32>
    %c0_i32 = arith.constant 0 : i32
    %42 = arith.cmpi eq, %arg2, %c0_i32 : i32
    %43 = arith.extui %42 : i1 to i32
    %c0_i32_25 = arith.constant 0 : i32
    %44 = arith.cmpi ne, %43, %c0_i32_25 : i32
    scf.if %44 {
      %cst_32 = arith.constant 0.000000e+00 : f32
      %51 = vector.broadcast %cst_32 : f32 to vector<8x512xf32>
      %c0_33 = arith.constant 0 : index
      %c0_34 = arith.constant 0 : index
      %52 = vector.load %arg14[%c0_33, %c0_34] : memref<8x512xf32, #tpu.memory_space<vmem>>, vector<8x512xf32>
      tpu.vector_store %arg14[%c0_33, %c0_34], %51 {strides = array<i32>} : memref<8x512xf32, #tpu.memory_space<vmem>>, vector<8x512xf32>,
    } else {
    }
    %c0_26 = arith.constant 0 : index
    %c0_27 = arith.constant 0 : index
    %45 = vector.load %arg14[%c0_26, %c0_27] : memref<8x512xf32, #tpu.memory_space<vmem>>, vector<8x512xf32>
    %46 = arith.addf %45, %41 : vector<8x512xf32>
    %c0_28 = arith.constant 0 : index
    %c0_29 = arith.constant 0 : index
    %47 = vector.load %arg14[%c0_28, %c0_29] : memref<8x512xf32, #tpu.memory_space<vmem>>, vector<8x512xf32>
    tpu.vector_store %arg14[%c0_28, %c0_29], %46 {strides = array<i32>} : memref<8x512xf32, #tpu.memory_space<vmem>>, vector<8x512xf32>,
    %c0_i32_30 = arith.constant 0 : i32
    %48 = arith.cmpi eq, %arg2, %c0_i32_30 : i32
    %49 = arith.extui %48 : i1 to i32
    %c0_i32_31 = arith.constant 0 : i32
    %50 = arith.cmpi ne, %49, %c0_i32_31 : i32
    scf.if %50 {
      %c0_32 = arith.constant 0 : index
      %c0_33 = arith.constant 0 : index
      %51 = vector.load %arg14[%c0_32, %c0_33] : memref<8x512xf32, #tpu.memory_space<vmem>>, vector<8x512xf32>
      %cst_34 = arith.constant 1.250000e-01 : f32
      %52 = vector.broadcast %cst_34 : f32 to vector<8x512xf32>
      %53 = arith.mulf %51, %52 : vector<8x512xf32>
      %54 = arith.truncf %53 : vector<8x512xf32> to vector<8x512xbf16>
      %c0_35 = arith.constant 0 : index
      %c0_36 = arith.constant 0 : index
      %55 = vector.load %arg11[%c0_35, %c0_36] : memref<512x128xbf16, #tpu.memory_space<vmem>>, vector<512x128xbf16>
      %cst_37 = arith.constant dense<0.000000e+00> : vector<8x128xf32>
      %56 = tpu.matmul %54, %55, %cst_37 {dimension_numbers = #tpu.dot_dimension_numbers<[1], [0], [0], [1], [0, 0, 1, 1], [], []>} : vector<8x512xbf16>, vector<512x128xbf16>, vector<8x128xf32> -> vector<8x128xf32>
      %c0_38 = arith.constant 0 : index
      %c0_39 = arith.constant 0 : index
      %57 = vector.load %arg12[%c0_38, %c0_39] : memref<1x128xf32, #tpu.memory_space<vmem>>, vector<1x128xf32>
      %58 = vector.broadcast %57 : vector<1x128xf32> to vector<8x128xf32>
      %59 = arith.addf %56, %58 : vector<8x128xf32>
      %c0_40 = arith.constant 0 : index
      %c0_41 = arith.constant 0 : index
      %c0_42 = arith.constant 0 : index
      %60 = vector.load %arg13[%c0_40, %c0_41, %c0_42] : memref<1x8x128xf32, #tpu.memory_space<vmem>>, vector<1x8x128xf32>
      %61 = vector.shape_cast %60 : vector<1x8x128xf32> to vector<8x128xf32>
      %62 = vector.shape_cast %59 : vector<8x128xf32> to vector<1x8x128xf32>
      tpu.vector_store %arg13[%c0_40, %c0_41, %c0_42], %62 {strides = array<i32>} : memref<1x8x128xf32, #tpu.memory_space<vmem>>, vector<1x8x128xf32>,
    } else {
    }
    return
  }
  func.func @transform_0(%arg0: i32, %arg1: i32, %arg2: i32) -> (i32, i32, i32) {
    %c0_i32 = arith.constant 0 : i32
    %c0_i32_0 = arith.constant 0 : i32
    return %arg0, %arg1, %c0_i32 : i32, i32, i32
  }
  func.func @transform_1(%arg0: i32, %arg1: i32, %arg2: i32) -> (i32, i32, i32) {
    %c0_i32 = arith.constant 0 : i32
    %c0_i32_0 = arith.constant 0 : i32
    return %arg0, %arg2, %c0_i32 : i32, i32, i32
  }
  func.func @transform_2(%arg0: i32, %arg1: i32, %arg2: i32) -> (i32, i32) {
    %c0_i32 = arith.constant 0 : i32
    %c0_i32_0 = arith.constant 0 : i32
    %c0_i32_1 = arith.constant 0 : i32
    return %c0_i32, %c0_i32_0 : i32, i32
  }
  func.func @transform_3(%arg0: i32, %arg1: i32, %arg2: i32) -> (i32, i32) {
    %c0_i32 = arith.constant 0 : i32
    %c0_i32_0 = arith.constant 0 : i32
    %c0_i32_1 = arith.constant 0 : i32
    return %c0_i32, %c0_i32_0 : i32, i32
  }
  func.func @transform_4(%arg0: i32, %arg1: i32, %arg2: i32) -> (i32, i32) {
    %c0_i32 = arith.constant 0 : i32
    %c0_i32_0 = arith.constant 0 : i32
    %c0_i32_1 = arith.constant 0 : i32
    return %c0_i32, %c0_i32_0 : i32, i32
  }
  func.func @transform_5(%arg0: i32, %arg1: i32, %arg2: i32) -> (i32, i32) {
    %c0_i32 = arith.constant 0 : i32
    %c0_i32_0 = arith.constant 0 : i32
    %c0_i32_1 = arith.constant 0 : i32
    return %c0_i32, %c0_i32_0 : i32, i32
  }
  func.func @transform_6(%arg0: i32, %arg1: i32, %arg2: i32) -> (i32, i32) {
    %c0_i32 = arith.constant 0 : i32
    %c0_i32_0 = arith.constant 0 : i32
    %c0_i32_1 = arith.constant 0 : i32
    return %c0_i32, %c0_i32_0 : i32, i32
  }
  func.func @transform_7(%arg0: i32, %arg1: i32, %arg2: i32) -> (i32, i32) {
    %c0_i32 = arith.constant 0 : i32
    %c0_i32_0 = arith.constant 0 : i32
    %c0_i32_1 = arith.constant 0 : i32
    return %c0_i32, %c0_i32_0 : i32, i32
  }
  func.func @transform_8(%arg0: i32, %arg1: i32, %arg2: i32) -> (i32, i32) {
    %c0_i32 = arith.constant 0 : i32
    %c0_i32_0 = arith.constant 0 : i32
    %c0_i32_1 = arith.constant 0 : i32
    return %c0_i32, %c0_i32_0 : i32, i32
  }
  func.func @transform_9(%arg0: i32, %arg1: i32, %arg2: i32) -> (i32, i32) {
    %c0_i32 = arith.constant 0 : i32
    %c0_i32_0 = arith.constant 0 : i32
    %c0_i32_1 = arith.constant 0 : i32
    return %c0_i32, %c0_i32_0 : i32, i32
  }
  func.func @transform_10(%arg0: i32, %arg1: i32, %arg2: i32) -> (i32, i32, i32) {
    %c0_i32 = arith.constant 0 : i32
    %c0_i32_0 = arith.constant 0 : i32
    return %arg0, %arg1, %c0_i32 : i32, i32, i32
  }
}

</mosaic_0001>

<llo_original>
// kernel: tpu_custom_call.1
$region0: #{tpu_custom_call.1}
  #allocation0 [shape = 'u32[]', space=smem, size = 0x4, offset = 0x4, fixed_abs, tag = 'smem constant byte address 0x4 - core index']
  #allocation1 [shape = 'u32[72,128]{1,0:T(1,128)}', space=vmem, size = 0x9000, scoped, tag = 'internal scratch']
  #allocation2 [shape = 'f32[8,512]{1,0:T(8,128)}', space=vmem, size = 0x4000, scoped, tag = 'scratch operand']
  %s0 = inlined_call_operand.hbm [shape: f32[2,8,128], index: 0, kind: input, shape index: {}]
  %s1 = inlined_call_operand.hbm [shape: f32[2,8,128], index: 1, kind: input, shape index: {}]
  %s2 = inlined_call_operand.hbm [shape: bf16[128,512], index: 2, kind: input, shape index: {}]
  %s3 = inlined_call_operand.hbm [shape: f32[1,512], index: 3, kind: input, shape index: {}]
  %s4 = inlined_call_operand.hbm [shape: bf16[512,256], index: 4, kind: input, shape index: {}]
  %s5 = inlined_call_operand.vmem [shape: f32[1,256], index: 5, kind: input, shape index: {}]
  %s6 = inlined_call_operand.hbm [shape: bf16[128,512], index: 6, kind: input, shape index: {}]
  %s7 = inlined_call_operand.vmem [shape: f32[1,512], index: 7, kind: input, shape index: {}]
  %s8 = inlined_call_operand.hbm [shape: bf16[512,128], index: 8, kind: input, shape index: {}]
  %s9 = inlined_call_operand.vmem [shape: f32[1,128], index: 9, kind: input, shape index: {}]
  %s10 = inlined_call_operand.hbm [shape: f32[2,8,128], index: 10, kind: output, shape index: {}]
  %s11 = sld [smem:[#allocation0]]
  $region109: #{tpu_custom_call.1} parent=0
    _
  %s13 = ssub.s32 1, %s11
  %s14 = scalar_select 0, %s13, %s11
  $region1: #{tpu_custom_call.1} parent=0
    #allocation3 [shape = 'u8[8192]{0}', space=vmem, size = 0x2000, scoped, tag = 'input window, operand 0']
    #allocation4 [shape = 's32[2]{0}', space=sflag, size = 0x8, scoped, tag = 'scoped memory for tpu_custom_call.1']
    #allocation5 [shape = 's32[2]{0}', space=sflag, size = 0x8, scoped, tag = 'scoped memory for tpu_custom_call.1']
    #allocation6 [shape = 'u8[8192]{0}', space=vmem, size = 0x2000, scoped, tag = 'input window, operand 1']
    #allocation7 [shape = 's32[2]{0}', space=sflag, size = 0x8, scoped, tag = 'scoped memory for tpu_custom_call.1']
    #allocation8 [shape = 'u8[131072]{0}', space=vmem, size = 0x20000, scoped, tag = 'input window, operand 2, single buffered']
    #allocation9 [shape = 'u8[2048]{0}', space=vmem, size = 0x800, scoped, tag = 'input window, operand 3, single buffered']
    #allocation10 [shape = 's32[1]{0}', space=sflag, size = 0x4, scoped, tag = 'scoped memory for tpu_custom_call.1']
    #allocation11 [shape = 'u8[262144]{0}', space=vmem, size = 0x40000, scoped, tag = 'input window, operand 4, single buffered']
    #allocation12 [shape = 'u8[131072]{0}', space=vmem, size = 0x20000, scoped, tag = 'input window, operand 6, single buffered']
    #allocation13 [shape = 's32[1]{0}', space=sflag, size = 0x4, scoped, tag = 'scoped memory for tpu_custom_call.1']
    #allocation14 [shape = 'u8[131072]{0}', space=vmem, size = 0x20000, scoped, tag = 'input window, operand 8, single buffered']
    #allocation15 [shape = 'u8[8192]{0}', space=vmem, size = 0x2000, scoped, tag = 'output window, operand 0']
    %15 = vsyncpa [#allocation4], 0
    %s16 = scalar_lea.sflag [#allocation4], 1
    %17 = vsyncpa %s16, 0
    %18 = vsyncpa [#allocation7], 0
    %s19 = scalar_lea.sflag [#allocation7], 1
    %20 = vsyncpa %s19, 0
    %21 = vsyncpa [#allocation10], 0
    %22 = vsyncpa [#allocation13], 0
    %23 = vsyncpa [#allocation5], 0
    %s24 = scalar_lea.sflag [#allocation5], 1
    %25 = vsyncpa %s24, 0
    loop: start=0, step=1, limit=4
    $region2: #{tpu_custom_call.1} parent=1 // loop_pre_header
      _
    $region3: #{tpu_custom_call.1} parent=1 // loop_header
      %s27 = sphi 0, %s31
      %p28 = scmp.ge.s32.totalorder %s27, 4
      %s34 = sphi 0, %s53
      %s35 = sphi 0, %s49
      %s36 = sphi 0, %s45
      %s37 = sphi 0, %s34
      %s38 = sphi 0, %s35
      %s39 = sphi 0, %s36
      %s40 = sphi 0, %s37
      %s41 = sphi 0, %s38
      %s42 = sphi 0, %s39
      %s58 = sphi 0, %s60
      %s61 = sphi 0, %s58
      %s62 = sphi 0, %s61
      %s78 = sphi 0, %s62
      %s86 = sphi 0, %s88
      %s89 = sphi 0, %s86
      %s90 = sphi 0, %s89
      %s106 = sphi 0, %s90
      %s110 = sphi 0, %s110
      %s112 = sphi 0, %s110
      %s113 = sphi 0, %s112
      %s127 = sphi 0, %s113
      %s131 = sphi 0, %s131
      %s133 = sphi 0, %s131
      %s134 = sphi 0, %s133
      %s148 = sphi 0, %s134
      %s152 = sphi 0, %s152
      %s154 = sphi 0, %s152
      %s155 = sphi 0, %s154
      %s169 = sphi 0, %s155
      %s173 = sphi 0, %s173
      %s175 = sphi 0, %s173
      %s176 = sphi 0, %s175
      %s190 = sphi 0, %s176
      %s194 = sphi 0, %s194
      %s196 = sphi 0, %s194
      %s197 = sphi 0, %s196
      %s211 = sphi 0, %s197
      %s215 = sphi 0, %s215
      %s217 = sphi 0, %s215
      %s218 = sphi 0, %s217
      %s232 = sphi 0, %s218
      %s236 = sphi 0, %s236
      %s238 = sphi 0, %s236
      %s239 = sphi 0, %s238
      %s253 = sphi 0, %s239
      %s257 = sphi 0, %s257
      %s259 = sphi 0, %s257
      %s260 = sphi 0, %s259
      %s274 = sphi 0, %s260
      %s282 = sphi 0, %s284
      %s285 = sphi 0, %s282
      %s286 = sphi 0, %s285
      %s302 = sphi 0, %s286
    $region4: #{tpu_custom_call.1} parent=1 // loop_header_branch
      %30 = sbr.rel (%p28) target = $region8
    $region5: #{tpu_custom_call.1} parent=1 // loop_body
      %s32 = ssub.s32 %s27, 1
      %s33 = ssub.s32 %s27, 2
      %s43 = sadd.s32 1, %s36
      %p44 = scmp.ge.s32.totalorder %s43, 1
      %s45 = scalar_select %p44, 0, %s43
      %s46 = sadd.s32 1, %s35
      %s47 = scalar_select %p44, %s46, %s35
      %p48 = scmp.ge.s32.totalorder %s47, 1
      %s49 = scalar_select %p48, 0, %s47
      %s50 = sadd.s32 1, %s34
      %s51 = scalar_select %p48, %s50, %s34
      %p52 = scmp.ge.s32.totalorder %s51, 2
      %s53 = scalar_select %p52, 0, %s51
      %s54 = ssub.s32 %s34, %s53
      %s55 = ssub.s32 %s35, %s49
      %s56 = sor.u32 %s54, %s55
      %p57 = scmp.eq.s32.totalorder %s56, 0
      %s59 = sadd.s32 %s58, 1
      %s60 = scalar_select %p57, %s58, %s59
      %p63 = pneg %p57
      %p64 = scmp.eq.s32.totalorder %s27, 1
      %p65 = por %p63, %p64
      %p66 = scmp.ne.s32.totalorder %s58, %s61
      %p67 = scmp.eq.s32.totalorder %s27, 0
      %p68 = por %p66, %p67
      %p69 = scmp.ne.s32.totalorder %s58, %s61
      %p70 = scmp.eq.s32.totalorder %s32, 1
      %p71 = por %p69, %p70
      %p72 = scmp.ne.s32.totalorder %s61, %s62
      %p73 = scmp.eq.s32.totalorder %s32, 0
      %p74 = por %p72, %p73
      %p75 = scmp.ne.s32.totalorder %s61, %s62
      %p76 = scmp.eq.s32.totalorder %s33, 1
      %p77 = por %p75, %p76
      %p79 = scmp.ne.s32.totalorder %s62, %s78
      %p80 = scmp.eq.s32.totalorder %s33, 0
      %p81 = por %p79, %p80
      %s82 = ssub.s32 %s34, %s53
      %s83 = ssub.s32 %s36, %s45
      %s84 = sor.u32 %s82, %s83
      %p85 = scmp.eq.s32.totalorder %s84, 0
      %s87 = sadd.s32 %s86, 1
      %s88 = scalar_select %p85, %s86, %s87
      %p91 = pneg %p85
      %p92 = scmp.eq.s32.totalorder %s27, 1
      %p93 = por %p91, %p92
      %p94 = scmp.ne.s32.totalorder %s86, %s89
      %p95 = scmp.eq.s32.totalorder %s27, 0
      %p96 = por %p94, %p95
      %p97 = scmp.ne.s32.totalorder %s86, %s89
      %p98 = scmp.eq.s32.totalorder %s32, 1
      %p99 = por %p97, %p98
      %p100 = scmp.ne.s32.totalorder %s89, %s90
      %p101 = scmp.eq.s32.totalorder %s32, 0
      %p102 = por %p100, %p101
      %p103 = scmp.ne.s32.totalorder %s89, %s90
      %p104 = scmp.eq.s32.totalorder %s33, 1
      %p105 = por %p103, %p104
      %p107 = scmp.ne.s32.totalorder %s90, %s106
      %p108 = scmp.eq.s32.totalorder %s33, 0
      %p109 = por %p107, %p108
      %s111 = sadd.s32 %s110, 1
      %p114 = scmp.eq.s32.totalorder %s27, 1
      %p115 = scmp.ne.s32.totalorder %s110, %s112
      %p116 = scmp.eq.s32.totalorder %s27, 0
      %p117 = por %p115, %p116
      %p118 = scmp.ne.s32.totalorder %s110, %s112
      %p119 = scmp.eq.s32.totalorder %s32, 1
      %p120 = por %p118, %p119
      %p121 = scmp.ne.s32.totalorder %s112, %s113
      %p122 = scmp.eq.s32.totalorder %s32, 0
      %p123 = por %p121, %p122
      %p124 = scmp.ne.s32.totalorder %s112, %s113
      %p125 = scmp.eq.s32.totalorder %s33, 1
      %p126 = por %p124, %p125
      %p128 = scmp.ne.s32.totalorder %s113, %s127
      %p129 = scmp.eq.s32.totalorder %s33, 0
      %p130 = por %p128, %p129
      %s132 = sadd.s32 %s131, 1
      %p135 = scmp.eq.s32.totalorder %s27, 1
      %p136 = scmp.ne.s32.totalorder %s131, %s133
      %p137 = scmp.eq.s32.totalorder %s27, 0
      %p138 = por %p136, %p137
      %p139 = scmp.ne.s32.totalorder %s131, %s133
      %p140 = scmp.eq.s32.totalorder %s32, 1
      %p141 = por %p139, %p140
      %p142 = scmp.ne.s32.totalorder %s133, %s134
      %p143 = scmp.eq.s32.totalorder %s32, 0
      %p144 = por %p142, %p143
      %p145 = scmp.ne.s32.totalorder %s133, %s134
      %p146 = scmp.eq.s32.totalorder %s33, 1
      %p147 = por %p145, %p146
      %p149 = scmp.ne.s32.totalorder %s134, %s148
      %p150 = scmp.eq.s32.totalorder %s33, 0
      %p151 = por %p149, %p150
      %s153 = sadd.s32 %s152, 1
      %p156 = scmp.eq.s32.totalorder %s27, 1
      %p157 = scmp.ne.s32.totalorder %s152, %s154
      %p158 = scmp.eq.s32.totalorder %s27, 0
      %p159 = por %p157, %p158
      %p160 = scmp.ne.s32.totalorder %s152, %s154
      %p161 = scmp.eq.s32.totalorder %s32, 1
      %p162 = por %p160, %p161
      %p163 = scmp.ne.s32.totalorder %s154, %s155
      %p164 = scmp.eq.s32.totalorder %s32, 0
      %p165 = por %p163, %p164
      %p166 = scmp.ne.s32.totalorder %s154, %s155
      %p167 = scmp.eq.s32.totalorder %s33, 1
      %p168 = por %p166, %p167
      %p170 = scmp.ne.s32.totalorder %s155, %s169
      %p171 = scmp.eq.s32.totalorder %s33, 0
      %p172 = por %p170, %p171
      %s174 = sadd.s32 %s173, 1
      %p177 = scmp.eq.s32.totalorder %s27, 1
      %p178 = scmp.ne.s32.totalorder %s173, %s175
      %p179 = scmp.eq.s32.totalorder %s27, 0
      %p180 = por %p178, %p179
      %p181 = scmp.ne.s32.totalorder %s173, %s175
      %p182 = scmp.eq.s32.totalorder %s32, 1
      %p183 = por %p181, %p182
      %p184 = scmp.ne.s32.totalorder %s175, %s176
      %p185 = scmp.eq.s32.totalorder %s32, 0
      %p186 = por %p184, %p185
      %p187 = scmp.ne.s32.totalorder %s175, %s176
      %p188 = scmp.eq.s32.totalorder %s33, 1
      %p189 = por %p187, %p188
      %p191 = scmp.ne.s32.totalorder %s176, %s190
      %p192 = scmp.eq.s32.totalorder %s33, 0
      %p193 = por %p191, %p192
      %s195 = sadd.s32 %s194, 1
      %p198 = scmp.eq.s32.totalorder %s27, 1
      %p199 = scmp.ne.s32.totalorder %s194, %s196
      %p200 = scmp.eq.s32.totalorder %s27, 0
      %p201 = por %p199, %p200
      %p202 = scmp.ne.s32.totalorder %s194, %s196
      %p203 = scmp.eq.s32.totalorder %s32, 1
      %p204 = por %p202, %p203
      %p205 = scmp.ne.s32.totalorder %s196, %s197
      %p206 = scmp.eq.s32.totalorder %s32, 0
      %p207 = por %p205, %p206
      %p208 = scmp.ne.s32.totalorder %s196, %s197
      %p209 = scmp.eq.s32.totalorder %s33, 1
      %p210 = por %p208, %p209
      %p212 = scmp.ne.s32.totalorder %s197, %s211
      %p213 = scmp.eq.s32.totalorder %s33, 0
      %p214 = por %p212, %p213
      %s216 = sadd.s32 %s215, 1
      %p219 = scmp.eq.s32.totalorder %s27, 1
      %p220 = scmp.ne.s32.totalorder %s215, %s217
      %p221 = scmp.eq.s32.totalorder %s27, 0
      %p222 = por %p220, %p221
      %p223 = scmp.ne.s32.totalorder %s215, %s217
      %p224 = scmp.eq.s32.totalorder %s32, 1
      %p225 = por %p223, %p224
      %p226 = scmp.ne.s32.totalorder %s217, %s218
      %p227 = scmp.eq.s32.totalorder %s32, 0
      %p228 = por %p226, %p227
      %p229 = scmp.ne.s32.totalorder %s217, %s218
      %p230 = scmp.eq.s32.totalorder %s33, 1
      %p231 = por %p229, %p230
      %p233 = scmp.ne.s32.totalorder %s218, %s232
      %p234 = scmp.eq.s32.totalorder %s33, 0
      %p235 = por %p233, %p234
      %s237 = sadd.s32 %s236, 1
      %p240 = scmp.eq.s32.totalorder %s27, 1
      %p241 = scmp.ne.s32.totalorder %s236, %s238
      %p242 = scmp.eq.s32.totalorder %s27, 0
      %p243 = por %p241, %p242
      %p244 = scmp.ne.s32.totalorder %s236, %s238
      %p245 = scmp.eq.s32.totalorder %s32, 1
      %p246 = por %p244, %p245
      %p247 = scmp.ne.s32.totalorder %s238, %s239
      %p248 = scmp.eq.s32.totalorder %s32, 0
      %p249 = por %p247, %p248
      %p250 = scmp.ne.s32.totalorder %s238, %s239
      %p251 = scmp.eq.s32.totalorder %s33, 1
      %p252 = por %p250, %p251
      %p254 = scmp.ne.s32.totalorder %s239, %s253
      %p255 = scmp.eq.s32.totalorder %s33, 0
      %p256 = por %p254, %p255
      %s258 = sadd.s32 %s257, 1
      %p261 = scmp.eq.s32.totalorder %s27, 1
      %p262 = scmp.ne.s32.totalorder %s257, %s259
      %p263 = scmp.eq.s32.totalorder %s27, 0
      %p264 = por %p262, %p263
      %p265 = scmp.ne.s32.totalorder %s257, %s259
      %p266 = scmp.eq.s32.totalorder %s32, 1
      %p267 = por %p265, %p266
      %p268 = scmp.ne.s32.totalorder %s259, %s260
      %p269 = scmp.eq.s32.totalorder %s32, 0
      %p270 = por %p268, %p269
      %p271 = scmp.ne.s32.totalorder %s259, %s260
      %p272 = scmp.eq.s32.totalorder %s33, 1
      %p273 = por %p271, %p272
      %p275 = scmp.ne.s32.totalorder %s260, %s274
      %p276 = scmp.eq.s32.totalorder %s33, 0
      %p277 = por %p275, %p276
      %s278 = ssub.s32 %s34, %s53
      %s279 = ssub.s32 %s35, %s49
      %s280 = sor.u32 %s278, %s279
      %p281 = scmp.eq.s32.totalorder %s280, 0
      %s283 = sadd.s32 %s282, 1
      %s284 = scalar_select %p281, %s282, %s283
      %p287 = pneg %p281
      %p288 = scmp.eq.s32.totalorder %s27, 1
      %p289 = por %p287, %p288
      %p290 = scmp.ne.s32.totalorder %s282, %s285
      %p291 = scmp.eq.s32.totalorder %s27, 0
      %p292 = por %p290, %p291
      %p293 = scmp.ne.s32.totalorder %s282, %s285
      %p294 = scmp.eq.s32.totalorder %s32, 1
      %p295 = por %p293, %p294
      %p296 = scmp.ne.s32.totalorder %s285, %s286
      %p297 = scmp.eq.s32.totalorder %s32, 0
      %p298 = por %p296, %p297
      %p299 = scmp.ne.s32.totalorder %s285, %s286
      %p300 = scmp.eq.s32.totalorder %s33, 1
      %p301 = por %p299, %p300
      %p303 = scmp.ne.s32.totalorder %s286, %s302
      %p304 = scmp.eq.s32.totalorder %s33, 0
      %p305 = por %p303, %p304
      %p306 = scmp.le.s32.totalorder 1, %s27
      %p307 = scmp.lt.s32.totalorder %s27, 3
      %p308 = pnand %p306, %p307
      %p309 = pneg %p308
      // Predicated region
      $region9: #{tpu_custom_call.1} parent=5 // pred_check
        _
      $region10: #{tpu_custom_call.1} parent=5 // pred_check_branch
        %311 = sbr.rel (%p308) target = $region12
      $region11: #{tpu_custom_call.1} parent=5 // pred_region
        %s312 = ssub.s32 %s27, 1
        // Predicated region
        $region13: #{tpu_custom_call.1} parent=11 // pred_check
          %p313 = pneg %p123
        $region14: #{tpu_custom_call.1} parent=11 // pred_check_branch
          %315 = sbr.rel (%p313) target = $region16
        $region15: #{tpu_custom_call.1} parent=11 // pred_region
          %317 = vsyncadd [#allocation7], 0
          %s318 = sshll.u32 %s2, 4
          %s319 = int_to_ptr.hbm [resolvable:$true] %s318
          %s320 = sshll.u32 [#allocation8], 4
          %s321 = int_to_ptr.vmem [resolvable:$true] %s320
          %326 = dma.hbm_to_vmem [thread:$0]  %s319, 4096, %s321, [#allocation7], 256, 256, 16
        $region16: #{tpu_custom_call.1} parent=11 // pred_fallthru
          _
        // Predicated region
        $region17: #{tpu_custom_call.1} parent=11 // pred_check
          %p327 = pneg %p144
        $region18: #{tpu_custom_call.1} parent=11 // pred_check_branch
          %329 = sbr.rel (%p327) target = $region20
        $region19: #{tpu_custom_call.1} parent=11 // pred_region
          %331 = vsyncadd [#allocation10], 0
          %s333 = sshll.u32 %s3, 4
          %s334 = int_to_ptr.hbm [resolvable:$true] %s333
          %s335 = sshll.u32 [#allocation9], 4
          %s336 = int_to_ptr.vmem [resolvable:$true] %s335
          %338 = dma.hbm_to_vmem [thread:$0]  %s334, 64, %s336, [#allocation10]
        $region20: #{tpu_custom_call.1} parent=11 // pred_fallthru
          _
        // Predicated region
        $region21: #{tpu_custom_call.1} parent=11 // pred_check
          %p339 = pneg %p165
        $region22: #{tpu_custom_call.1} parent=11 // pred_check_branch
          %341 = sbr.rel (%p339) target = $region24
        $region23: #{tpu_custom_call.1} parent=11 // pred_region
          %343 = vsyncadd [#allocation10], 0
          %s344 = sshll.u32 %s4, 4
          %s345 = int_to_ptr.hbm [resolvable:$true] %s344
          %s346 = sshll.u32 [#allocation11], 4
          %s347 = int_to_ptr.vmem [resolvable:$true] %s346
          %352 = dma.hbm_to_vmem [thread:$0]  %s345, 8192, %s347, [#allocation10], 128, 128, 8
        $region24: #{tpu_custom_call.1} parent=11 // pred_fallthru
          _
        // Predicated region
        $region25: #{tpu_custom_call.1} parent=11 // pred_check
          %p353 = pneg %p186
        $region26: #{tpu_custom_call.1} parent=11 // pred_check_branch
          %355 = sbr.rel (%p353) target = $region28
        $region27: #{tpu_custom_call.1} parent=11 // pred_region
          _
        $region28: #{tpu_custom_call.1} parent=11 // pred_fallthru
          _
        // Predicated region
        $region29: #{tpu_custom_call.1} parent=11 // pred_check
          %p356 = pneg %p207
        $region30: #{tpu_custom_call.1} parent=11 // pred_check_branch
          %358 = sbr.rel (%p356) target = $region32
        $region31: #{tpu_custom_call.1} parent=11 // pred_region
          %360 = vsyncadd [#allocation13], 0
          %s361 = sshll.u32 %s6, 4
          %s362 = int_to_ptr.hbm [resolvable:$true] %s361
          %s363 = sshll.u32 [#allocation12], 4
          %s364 = int_to_ptr.vmem [resolvable:$true] %s363
          %369 = dma.hbm_to_vmem [thread:$0]  %s362, 4096, %s364, [#allocation13], 256, 256, 16
        $region32: #{tpu_custom_call.1} parent=11 // pred_fallthru
          _
        // Predicated region
        $region33: #{tpu_custom_call.1} parent=11 // pred_check
          %p370 = pneg %p228
        $region34: #{tpu_custom_call.1} parent=11 // pred_check_branch
          %372 = sbr.rel (%p370) target = $region36
        $region35: #{tpu_custom_call.1} parent=11 // pred_region
          _
        $region36: #{tpu_custom_call.1} parent=11 // pred_fallthru
          _
        // Predicated region
        $region37: #{tpu_custom_call.1} parent=11 // pred_check
          %p373 = pneg %p249
        $region38: #{tpu_custom_call.1} parent=11 // pred_check_branch
          %375 = sbr.rel (%p373) target = $region40
        $region39: #{tpu_custom_call.1} parent=11 // pred_region
          %377 = vsyncadd [#allocation13], 0
          %s378 = sshll.u32 %s8, 4
          %s379 = int_to_ptr.hbm [resolvable:$true] %s378
          %s380 = sshll.u32 [#allocation14], 4
          %s381 = int_to_ptr.vmem [resolvable:$true] %s380
          %386 = dma.hbm_to_vmem [thread:$0]  %s379, 4096, %s381, [#allocation13], 64, 64, 4
        $region40: #{tpu_custom_call.1} parent=11 // pred_fallthru
          _
        // Predicated region
        $region41: #{tpu_custom_call.1} parent=11 // pred_check
          %p387 = pneg %p270
        $region42: #{tpu_custom_call.1} parent=11 // pred_check_branch
          %389 = sbr.rel (%p387) target = $region44
        $region43: #{tpu_custom_call.1} parent=11 // pred_region
          _
        $region44: #{tpu_custom_call.1} parent=11 // pred_fallthru
          _
      $region12: #{tpu_custom_call.1} parent=5 // pred_fallthru
        _
      %p390 = scmp.lt.s32.totalorder %s27, 2
      // Predicated region
      $region45: #{tpu_custom_call.1} parent=5 // pred_check
        %p391 = pneg %p390
      $region46: #{tpu_custom_call.1} parent=5 // pred_check_branch
        %393 = sbr.rel (%p391) target = $region48
      $region47: #{tpu_custom_call.1} parent=5 // pred_region
        // Predicated region
        $region49: #{tpu_custom_call.1} parent=47 // pred_check
          %p394 = pneg %p68
        $region50: #{tpu_custom_call.1} parent=47 // pred_check_branch
          %396 = sbr.rel (%p394) target = $region52
        $region51: #{tpu_custom_call.1} parent=47 // pred_region
          %s397 = sand.u32 %s58, 1
          %s398 = scalar_lea.sflag [#allocation4], %s397
          %s399 = sand.u32 %s58, 1
          %s400 = smul.addr %s399, 8
          %s401 = scalar_lea.vmem [#allocation3], %s400
          %403 = vsyncadd %s398, 0
          %s404 = sadd.s32 %s35, %s34
          %s405 = smul.addr %s404, 8
          %s406 = scalar_lea.hbm %s0, %s405
          %s408 = sshll.u32 %s406, 4
          %s409 = int_to_ptr.hbm [resolvable:$true] %s408
          %s410 = sshll.u32 %s401, 4
          %s411 = int_to_ptr.vmem [resolvable:$true] %s410
          %413 = dma.hbm_to_vmem [thread:$0]  %s409, 128, %s411, %s398
        $region52: #{tpu_custom_call.1} parent=47 // pred_fallthru
          _
        // Predicated region
        $region53: #{tpu_custom_call.1} parent=47 // pred_check
          %p414 = pneg %p96
        $region54: #{tpu_custom_call.1} parent=47 // pred_check_branch
          %416 = sbr.rel (%p414) target = $region56
        $region55: #{tpu_custom_call.1} parent=47 // pred_region
          %s417 = sand.u32 %s27, 1
          %s418 = scalar_lea.sflag [#allocation7], %s417
          %s419 = sand.u32 %s86, 1
          %s420 = smul.addr %s419, 8
          %s421 = scalar_lea.vmem [#allocation6], %s420
          %423 = vsyncadd %s418, 0
          %s424 = sadd.s32 %s36, %s34
          %s425 = smul.addr %s424, 8
          %s426 = scalar_lea.hbm %s1, %s425
          %s428 = sshll.u32 %s426, 4
          %s429 = int_to_ptr.hbm [resolvable:$true] %s428
          %s430 = sshll.u32 %s421, 4
          %s431 = int_to_ptr.vmem [resolvable:$true] %s430
          %433 = dma.hbm_to_vmem [thread:$0]  %s429, 128, %s431, %s418
        $region56: #{tpu_custom_call.1} parent=47 // pred_fallthru
          _
      $region48: #{tpu_custom_call.1} parent=5 // pred_fallthru
        _
      %p434 = scmp.le.s32.totalorder 1, %s27
      %p435 = scmp.lt.s32.totalorder %s27, 3
      %p436 = pnand %p434, %p435
      %p437 = pneg %p436
      // Predicated region
      $region57: #{tpu_custom_call.1} parent=5 // pred_check
        _
      $region58: #{tpu_custom_call.1} parent=5 // pred_check_branch
        %439 = sbr.rel (%p436) target = $region60
      $region59: #{tpu_custom_call.1} parent=5 // pred_region
        %s440 = ssub.s32 %s27, 1
        %s441 = sand.u32 %s61, 1
        %s442 = scalar_lea.sflag [#allocation4], %s441
        %s443 = sand.u32 %s61, 1
        %s444 = smul.addr %s443, 8
        %s445 = scalar_lea.vmem [#allocation3], %s444
        // Predicated region
        $region61: #{tpu_custom_call.1} parent=59 // pred_check
          %p446 = pneg %p74
        $region62: #{tpu_custom_call.1} parent=59 // pred_check_branch
          %448 = sbr.rel (%p446) target = $region64
        $region63: #{tpu_custom_call.1} parent=59 // pred_region
          %450 = dma.done %s442, 128
        $region64: #{tpu_custom_call.1} parent=59 // pred_fallthru
          _
        %s451 = sand.u32 %s32, 1
        %s452 = scalar_lea.sflag [#allocation7], %s451
        %s453 = sand.u32 %s89, 1
        %s454 = smul.addr %s453, 8
        %s455 = scalar_lea.vmem [#allocation6], %s454
        // Predicated region
        $region65: #{tpu_custom_call.1} parent=59 // pred_check
          %p456 = pneg %p102
        $region66: #{tpu_custom_call.1} parent=59 // pred_check_branch
          %458 = sbr.rel (%p456) target = $region68
        $region67: #{tpu_custom_call.1} parent=59 // pred_region
          %460 = dma.done %s452, 128
        $region68: #{tpu_custom_call.1} parent=59 // pred_fallthru
          _
        // Predicated region
        $region69: #{tpu_custom_call.1} parent=59 // pred_check
          %p461 = pneg %p123
        $region70: #{tpu_custom_call.1} parent=59 // pred_check_branch
          %463 = sbr.rel (%p461) target = $region72
        $region71: #{tpu_custom_call.1} parent=59 // pred_region
          %465 = dma.done [#allocation7], 4096
        $region72: #{tpu_custom_call.1} parent=59 // pred_fallthru
          _
        // Predicated region
        $region73: #{tpu_custom_call.1} parent=59 // pred_check
          %p466 = pneg %p144
        $region74: #{tpu_custom_call.1} parent=59 // pred_check_branch
          %468 = sbr.rel (%p466) target = $region76
        $region75: #{tpu_custom_call.1} parent=59 // pred_region
          %470 = dma.done [#allocation10], 64
        $region76: #{tpu_custom_call.1} parent=59 // pred_fallthru
          _
        // Predicated region
        $region77: #{tpu_custom_call.1} parent=59 // pred_check
          %p471 = pneg %p165
        $region78: #{tpu_custom_call.1} parent=59 // pred_check_branch
          %473 = sbr.rel (%p471) target = $region80
        $region79: #{tpu_custom_call.1} parent=59 // pred_region
          %475 = dma.done [#allocation10], 8192
        $region80: #{tpu_custom_call.1} parent=59 // pred_fallthru
          _
        // Predicated region
        $region81: #{tpu_custom_call.1} parent=59 // pred_check
          %p476 = pneg %p207
        $region82: #{tpu_custom_call.1} parent=59 // pred_check_branch
          %478 = sbr.rel (%p476) target = $region84
        $region83: #{tpu_custom_call.1} parent=59 // pred_region
          %480 = dma.done [#allocation13], 4096
        $region84: #{tpu_custom_call.1} parent=59 // pred_fallthru
          _
        // Predicated region
        $region85: #{tpu_custom_call.1} parent=59 // pred_check
          %p481 = pneg %p249
        $region86: #{tpu_custom_call.1} parent=59 // pred_check_branch
          %483 = sbr.rel (%p481) target = $region88
        $region87: #{tpu_custom_call.1} parent=59 // pred_region
          %485 = dma.done [#allocation13], 4096
        $region88: #{tpu_custom_call.1} parent=59 // pred_fallthru
          _
        %s486 = sand.u32 %s61, 1
        %s487 = scalar_lea.sflag [#allocation4], %s486
        %s488 = sand.u32 %s61, 1
        %s489 = smul.addr %s488, 8
        %s490 = scalar_lea.vmem [#allocation3], %s489
        %p491 = pneg %p74
        %p492 = pneg %p71
        %s493 = sand.u32 %s32, 1
        %s494 = scalar_lea.sflag [#allocation7], %s493
        %s495 = sand.u32 %s89, 1
        %s496 = smul.addr %s495, 8
        %s497 = scalar_lea.vmem [#allocation6], %s496
        %p498 = pneg %p102
        %p499 = pneg %p99
        %p500 = pneg %p123
        %p501 = pneg %p120
        %p502 = pneg %p144
        %p503 = pneg %p141
        %p504 = pneg %p165
        %p505 = pneg %p162
        %p506 = pneg %p186
        %p507 = pneg %p183
        %p508 = pneg %p207
        %p509 = pneg %p204
        %p510 = pneg %p228
        %p511 = pneg %p225
        %p512 = pneg %p249
        %p513 = pneg %p246
        %p514 = pneg %p270
        %p515 = pneg %p267
        %p516 = pneg %p298
        %p517 = pneg %p295
        %s518 = sand.u32 %s285, 1
        %s519 = scalar_lea.sflag [#allocation5], %s518
        %s520 = sand.u32 %s285, 1
        %s521 = smul.addr %s520, 8
        %s522 = scalar_lea.vmem [#allocation15], %s521
        %v523 = vld [vmem:[%s455] sm:$0xff]
        %v524 = vpack.c.bf16 %v523, %v523
        %v525 = vld [vmem:[#allocation8] sm:$0xff]
        %v526 = vld [vmem:[#allocation8 + $0x8] sm:$0xff]
        %v527 = vld [vmem:[#allocation8 + $0x10] sm:$0xff]
        %v528 = vld [vmem:[#allocation8 + $0x18] sm:$0xff]
        %v529 = vld [vmem:[#allocation8 + $0x20] sm:$0xff]
        %v530 = vld [vmem:[#allocation8 + $0x28] sm:$0xff]
        %v531 = vld [vmem:[#allocation8 + $0x30] sm:$0xff]
        %v532 = vld [vmem:[#allocation8 + $0x38] sm:$0xff]
        %v533 = vld [vmem:[#allocation8 + $0x40] sm:$0xff]
        %v534 = vld [vmem:[#allocation8 + $0x48] sm:$0xff]
        %v535 = vld [vmem:[#allocation8 + $0x50] sm:$0xff]
        %v536 = vld [vmem:[#allocation8 + $0x58] sm:$0xff]
        %v537 = vld [vmem:[#allocation8 + $0x60] sm:$0xff]
        %v538 = vld [vmem:[#allocation8 + $0x68] sm:$0xff]
        %v539 = vld [vmem:[#allocation8 + $0x70] sm:$0xff]
        %v540 = vld [vmem:[#allocation8 + $0x78] sm:$0xff]
        %v541 = vld [vmem:[#allocation8 + $0x80] sm:$0xff]
        %v542 = vld [vmem:[#allocation8 + $0x88] sm:$0xff]
        %v543 = vld [vmem:[#allocation8 + $0x90] sm:$0xff]
        %v544 = vld [vmem:[#allocation8 + $0x98] sm:$0xff]
        %v545 = vld [vmem:[#allocation8 + $0xa0] sm:$0xff]
        %v546 = vld [vmem:[#allocation8 + $0xa8] sm:$0xff]
        %v547 = vld [vmem:[#allocation8 + $0xb0] sm:$0xff]
        %v548 = vld [vmem:[#allocation8 + $0xb8] sm:$0xff]
        %v549 = vld [vmem:[#allocation8 + $0xc0] sm:$0xff]
        %v550 = vld [vmem:[#allocation8 + $0xc8] sm:$0xff]
        %v551 = vld [vmem:[#allocation8 + $0xd0] sm:$0xff]
        %v552 = vld [vmem:[#allocation8 + $0xd8] sm:$0xff]
        %v553 = vld [vmem:[#allocation8 + $0xe0] sm:$0xff]
        %v554 = vld [vmem:[#allocation8 + $0xe8] sm:$0xff]
        %v555 = vld [vmem:[#allocation8 + $0xf0] sm:$0xff]
        %v556 = vld [vmem:[#allocation8 + $0xf8] sm:$0xff]
        %v557 = vld [vmem:[#allocation9] sm:$0xf]
        %v559 = vperm.slane %v557, 0
        %v560 = vperm.slane %v557, 1
        %v561 = vperm.slane %v557, 2
        %v562 = vperm.slane %v557, 3
        %v599 = vunpack.c.l.b16 %v525
        %v600 = vunpack.c.h.b16 %v525
        %v601 = vunpack.c.l.b16 %v526
        %v602 = vunpack.c.h.b16 %v526
        %v603 = vunpack.c.l.b16 %v527
        %v604 = vunpack.c.h.b16 %v527
        %v605 = vunpack.c.l.b16 %v528
        %v606 = vunpack.c.h.b16 %v528
        %v607 = vunpack.c.l.b16 %v529
        %v608 = vunpack.c.h.b16 %v529
        %v609 = vunpack.c.l.b16 %v530
        %v610 = vunpack.c.h.b16 %v530
        %v611 = vunpack.c.l.b16 %v531
        %v612 = vunpack.c.h.b16 %v531
        %v613 = vunpack.c.l.b16 %v532
        %v614 = vunpack.c.h.b16 %v532
        %v615 = vunpack.c.l.b16 %v533
        %v616 = vunpack.c.h.b16 %v533
        %v617 = vunpack.c.l.b16 %v534
        %v618 = vunpack.c.h.b16 %v534
        %v619 = vunpack.c.l.b16 %v535
        %v620 = vunpack.c.h.b16 %v535
        %v621 = vunpack.c.l.b16 %v536
        %v622 = vunpack.c.h.b16 %v536
        %v623 = vunpack.c.l.b16 %v537
        %v624 = vunpack.c.h.b16 %v537
        %v625 = vunpack.c.l.b16 %v538
        %v626 = vunpack.c.h.b16 %v538
        %v627 = vunpack.c.l.b16 %v539
        %v628 = vunpack.c.h.b16 %v539
        %v629 = vunpack.c.l.b16 %v540
        %v630 = vunpack.c.h.b16 %v540
        %v631 = vunpack.c.l.b16 %v541
        %v632 = vunpack.c.h.b16 %v541
        %v633 = vunpack.c.l.b16 %v542
        %v634 = vunpack.c.h.b16 %v542
        %v635 = vunpack.c.l.b16 %v543
        %v636 = vunpack.c.h.b16 %v543
        %v637 = vunpack.c.l.b16 %v544
        %v638 = vunpack.c.h.b16 %v544
        %v639 = vunpack.c.l.b16 %v545
        %v640 = vunpack.c.h.b16 %v545
        %v641 = vunpack.c.l.b16 %v546
        %v642 = vunpack.c.h.b16 %v546
        %v643 = vunpack.c.l.b16 %v547
        %v644 = vunpack.c.h.b16 %v547
        %v645 = vunpack.c.l.b16 %v548
        %v646 = vunpack.c.h.b16 %v548
        %v647 = vunpack.c.l.b16 %v549
        %v648 = vunpack.c.h.b16 %v549
        %v649 = vunpack.c.l.b16 %v550
        %v650 = vunpack.c.h.b16 %v550
        %v651 = vunpack.c.l.b16 %v551
        %v652 = vunpack.c.h.b16 %v551
        %v653 = vunpack.c.l.b16 %v552
        %v654 = vunpack.c.h.b16 %v552
        %v655 = vunpack.c.l.b16 %v553
        %v656 = vunpack.c.h.b16 %v553
        %v657 = vunpack.c.l.b16 %v554
        %v658 = vunpack.c.h.b16 %v554
        %v659 = vunpack.c.l.b16 %v555
        %v660 = vunpack.c.h.b16 %v555
        %v661 = vunpack.c.l.b16 %v556
        %v662 = vunpack.c.h.b16 %v556
        %v663 = vpack.c.b16 %v603, %v599
        %v664 = vpack.c.b16 %v604, %v600
        %v665 = vpack.c.b16 %v605, %v601
        %v666 = vpack.c.b16 %v606, %v602
        %v667 = vpack.c.b16 %v611, %v607
        %v668 = vpack.c.b16 %v612, %v608
        %v669 = vpack.c.b16 %v613, %v609
        %v670 = vpack.c.b16 %v614, %v610
        %v671 = vpack.c.b16 %v619, %v615
        %v672 = vpack.c.b16 %v620, %v616
        %v673 = vpack.c.b16 %v621, %v617
        %v674 = vpack.c.b16 %v622, %v618
        %v675 = vpack.c.b16 %v627, %v623
        %v676 = vpack.c.b16 %v628, %v624
        %v677 = vpack.c.b16 %v629, %v625
        %v678 = vpack.c.b16 %v630, %v626
        %v679 = vpack.c.b16 %v635, %v631
        %v680 = vpack.c.b16 %v636, %v632
        %v681 = vpack.c.b16 %v637, %v633
        %v682 = vpack.c.b16 %v638, %v634
        %v683 = vpack.c.b16 %v643, %v639
        %v684 = vpack.c.b16 %v644, %v640
        %v685 = vpack.c.b16 %v645, %v641
        %v686 = vpack.c.b16 %v646, %v642
        %v687 = vpack.c.b16 %v651, %v647
        %v688 = vpack.c.b16 %v652, %v648
        %v689 = vpack.c.b16 %v653, %v649
        %v690 = vpack.c.b16 %v654, %v650
        %v691 = vpack.c.b16 %v659, %v655
        %v692 = vpack.c.b16 %v660, %v656
        %v693 = vpack.c.b16 %v661, %v657
        %v694 = vpack.c.b16 %v662, %v658
        %727 = vmatpush.bf16.msra.mxu0 %v691
        %728 = vmatpush.bf16.msra.mxu0 %v687
        %729 = vmatpush.bf16.msra.mxu0 %v683
        %730 = vmatpush.bf16.msra.mxu0 %v679
        %731 = vmatpush.bf16.msra.mxu0 %v675
        %732 = vmatpush.bf16.msra.mxu0 %v671
        %733 = vmatpush.bf16.msra.mxu0 %v667
        %734 = vmatpush.bf16.msra.mxu0 %v663
        %735 = vmatmul.bf16.gmra.mxu0 %v524
        %v736 = vpop.f32.mrf.mxu0
        %v737 = vadd.f32 %v559, %v736
        %v738 = vpop.f32.mrf.mxu0
        %739 = vdwg.mxu0
        %740 = vmatpush.bf16.msra.mxu0 %v692
        %741 = vmatpush.bf16.msra.mxu0 %v688
        %742 = vmatpush.bf16.msra.mxu0 %v684
        %743 = vmatpush.bf16.msra.mxu0 %v680
        %744 = vmatpush.bf16.msra.mxu0 %v676
        %745 = vmatpush.bf16.msra.mxu0 %v672
        %746 = vmatpush.bf16.msra.mxu0 %v668
        %747 = vmatpush.bf16.msra.mxu0 %v664
        %748 = vmatmul.bf16.gmra.mxu0 %v524
        %v749 = vpop.f32.mrf.mxu0
        %v750 = vadd.f32 %v560, %v749
        %v751 = vpop.f32.mrf.mxu0
        %752 = vdwg.mxu0
        %753 = vmatpush.bf16.msra.mxu0 %v693
        %754 = vmatpush.bf16.msra.mxu0 %v689
        %755 = vmatpush.bf16.msra.mxu0 %v685
        %756 = vmatpush.bf16.msra.mxu0 %v681
        %757 = vmatpush.bf16.msra.mxu0 %v677
        %758 = vmatpush.bf16.msra.mxu0 %v673
        %759 = vmatpush.bf16.msra.mxu0 %v669
        %760 = vmatpush.bf16.msra.mxu0 %v665
        %761 = vmatmul.bf16.gmra.mxu0 %v524
        %v762 = vpop.f32.mrf.mxu0
        %v763 = vadd.f32 %v561, %v762
        %v764 = vpop.f32.mrf.mxu0
        %765 = vdwg.mxu0
        %766 = vmatpush.bf16.msra.mxu0 %v694
        %767 = vmatpush.bf16.msra.mxu0 %v690
        %768 = vmatpush.bf16.msra.mxu0 %v686
        %769 = vmatpush.bf16.msra.mxu0 %v682
        %770 = vmatpush.bf16.msra.mxu0 %v678
        %771 = vmatpush.bf16.msra.mxu0 %v674
        %772 = vmatpush.bf16.msra.mxu0 %v670
        %773 = vmatpush.bf16.msra.mxu0 %v666
        %774 = vmatmul.bf16.gmra.mxu0 %v524
        %v775 = vpop.f32.mrf.mxu0
        %v776 = vadd.f32 %v562, %v775
        %v777 = vpop.f32.mrf.mxu0
        %778 = vdwg.mxu0
        %v779 = vmax.f32 %v737, 0.0
        %v780 = vmax.f32 %v750, 0.0
        %v781 = vmax.f32 %v763, 0.0
        %v782 = vmax.f32 %v776, 0.0
        %v783 = vpack.c.bf16 %v779, %v779
        %v784 = vpack.c.bf16 %v780, %v780
        %v785 = vpack.c.bf16 %v781, %v781
        %v786 = vpack.c.bf16 %v782, %v782
        %v787 = vld [vmem:[#allocation11] sm:$0xff]
        %v788 = vld [vmem:[#allocation11 + $0x8] sm:$0xff]
        %v789 = vld [vmem:[#allocation11 + $0x10] sm:$0xff]
        %v790 = vld [vmem:[#allocation11 + $0x18] sm:$0xff]
        %v791 = vld [vmem:[#allocation11 + $0x20] sm:$0xff]
        %v792 = vld [vmem:[#allocation11 + $0x28] sm:$0xff]
        %v793 = vld [vmem:[#allocation11 + $0x30] sm:$0xff]
        %v794 = vld [vmem:[#allocation11 + $0x38] sm:$0xff]
        %v795 = vld [vmem:[#allocation11 + $0x40] sm:$0xff]
        %v796 = vld [vmem:[#allocation11 + $0x48] sm:$0xff]
        %v797 = vld [vmem:[#allocation11 + $0x50] sm:$0xff]
        %v798 = vld [vmem:[#allocation11 + $0x58] sm:$0xff]
        %v799 = vld [vmem:[#allocation11 + $0x60] sm:$0xff]
        %v800 = vld [vmem:[#allocation11 + $0x68] sm:$0xff]
        %v801 = vld [vmem:[#allocation11 + $0x70] sm:$0xff]
        %v802 = vld [vmem:[#allocation11 + $0x78] sm:$0xff]
        %v803 = vld [vmem:[#allocation11 + $0x80] sm:$0xff]
        %v804 = vld [vmem:[#allocation11 + $0x88] sm:$0xff]
        %v805 = vld [vmem:[#allocation11 + $0x90] sm:$0xff]
        %v806 = vld [vmem:[#allocation11 + $0x98] sm:$0xff]
        %v807 = vld [vmem:[#allocation11 + $0xa0] sm:$0xff]
        %v808 = vld [vmem:[#allocation11 + $0xa8] sm:$0xff]
        %v809 = vld [vmem:[#allocation11 + $0xb0] sm:$0xff]
        %v810 = vld [vmem:[#allocation11 + $0xb8] sm:$0xff]
        %v811 = vld [vmem:[#allocation11 + $0xc0] sm:$0xff]
        %v812 = vld [vmem:[#allocation11 + $0xc8] sm:$0xff]
        %v813 = vld [vmem:[#allocation11 + $0xd0] sm:$0xff]
        %v814 = vld [vmem:[#allocation11 + $0xd8] sm:$0xff]
        %v815 = vld [vmem:[#allocation11 + $0xe0] sm:$0xff]
        %v816 = vld [vmem:[#allocation11 + $0xe8] sm:$0xff]
        %v817 = vld [vmem:[#allocation11 + $0xf0] sm:$0xff]
        %v818 = vld [vmem:[#allocation11 + $0xf8] sm:$0xff]
        %v819 = vld [vmem:[#allocation11 + $0x100] sm:$0xff]
        %v820 = vld [vmem:[#allocation11 + $0x108] sm:$0xff]
        %v821 = vld [vmem:[#allocation11 + $0x110] sm:$0xff]
        %v822 = vld [vmem:[#allocation11 + $0x118] sm:$0xff]
        %v823 = vld [vmem:[#allocation11 + $0x120] sm:$0xff]
        %v824 = vld [vmem:[#allocation11 + $0x128] sm:$0xff]
        %v825 = vld [vmem:[#allocation11 + $0x130] sm:$0xff]
        %v826 = vld [vmem:[#allocation11 + $0x138] sm:$0xff]
        %v827 = vld [vmem:[#allocation11 + $0x140] sm:$0xff]
        %v828 = vld [vmem:[#allocation11 + $0x148] sm:$0xff]
        %v829 = vld [vmem:[#allocation11 + $0x150] sm:$0xff]
        %v830 = vld [vmem:[#allocation11 + $0x158] sm:$0xff]
        %v831 = vld [vmem:[#allocation11 + $0x160] sm:$0xff]
        %v832 = vld [vmem:[#allocation11 + $0x168] sm:$0xff]
        %v833 = vld [vmem:[#allocation11 + $0x170] sm:$0xff]
        %v834 = vld [vmem:[#allocation11 + $0x178] sm:$0xff]
        %v835 = vld [vmem:[#allocation11 + $0x180] sm:$0xff]
        %v836 = vld [vmem:[#allocation11 + $0x188] sm:$0xff]
        %v837 = vld [vmem:[#allocation11 + $0x190] sm:$0xff]
        %v838 = vld [vmem:[#allocation11 + $0x198] sm:$0xff]
        %v839 = vld [vmem:[#allocation11 + $0x1a0] sm:$0xff]
        %v840 = vld [vmem:[#allocation11 + $0x1a8] sm:$0xff]
        %v841 = vld [vmem:[#allocation11 + $0x1b0] sm:$0xff]
        %v842 = vld [vmem:[#allocation11 + $0x1b8] sm:$0xff]
        %v843 = vld [vmem:[#allocation11 + $0x1c0] sm:$0xff]
        %v844 = vld [vmem:[#allocation11 + $0x1c8] sm:$0xff]
        %v845 = vld [vmem:[#allocation11 + $0x1d0] sm:$0xff]
        %v846 = vld [vmem:[#allocation11 + $0x1d8] sm:$0xff]
        %v847 = vld [vmem:[#allocation11 + $0x1e0] sm:$0xff]
        %v848 = vld [vmem:[#allocation11 + $0x1e8] sm:$0xff]
        %v849 = vld [vmem:[#allocation11 + $0x1f0] sm:$0xff]
        %v850 = vld [vmem:[#allocation11 + $0x1f8] sm:$0xff]
        %v851 = vld [vmem:[%s5] sm:$0x3]
        %v853 = vperm.slane %v851, 0
        %v854 = vperm.slane %v851, 1
        %v921 = vunpack.c.l.b16 %v787
        %v922 = vunpack.c.h.b16 %v787
        %v923 = vunpack.c.l.b16 %v788
        %v924 = vunpack.c.h.b16 %v788
        %v925 = vunpack.c.l.b16 %v789
        %v926 = vunpack.c.h.b16 %v789
        %v927 = vunpack.c.l.b16 %v790
        %v928 = vunpack.c.h.b16 %v790
        %v929 = vunpack.c.l.b16 %v791
        %v930 = vunpack.c.h.b16 %v791
        %v931 = vunpack.c.l.b16 %v792
        %v932 = vunpack.c.h.b16 %v792
        %v933 = vunpack.c.l.b16 %v793
        %v934 = vunpack.c.h.b16 %v793
        %v935 = vunpack.c.l.b16 %v794
        %v936 = vunpack.c.h.b16 %v794
        %v937 = vunpack.c.l.b16 %v795
        %v938 = vunpack.c.h.b16 %v795
        %v939 = vunpack.c.l.b16 %v796
        %v940 = vunpack.c.h.b16 %v796
        %v941 = vunpack.c.l.b16 %v797
        %v942 = vunpack.c.h.b16 %v797
        %v943 = vunpack.c.l.b16 %v798
        %v944 = vunpack.c.h.b16 %v798
        %v945 = vunpack.c.l.b16 %v799
        %v946 = vunpack.c.h.b16 %v799
        %v947 = vunpack.c.l.b16 %v800
        %v948 = vunpack.c.h.b16 %v800
        %v949 = vunpack.c.l.b16 %v801
        %v950 = vunpack.c.h.b16 %v801
        %v951 = vunpack.c.l.b16 %v802
        %v952 = vunpack.c.h.b16 %v802
        %v953 = vunpack.c.l.b16 %v803
        %v954 = vunpack.c.h.b16 %v803
        %v955 = vunpack.c.l.b16 %v804
        %v956 = vunpack.c.h.b16 %v804
        %v957 = vunpack.c.l.b16 %v805
        %v958 = vunpack.c.h.b16 %v805
        %v959 = vunpack.c.l.b16 %v806
        %v960 = vunpack.c.h.b16 %v806
        %v961 = vunpack.c.l.b16 %v807
        %v962 = vunpack.c.h.b16 %v807
        %v963 = vunpack.c.l.b16 %v808
        %v964 = vunpack.c.h.b16 %v808
        %v965 = vunpack.c.l.b16 %v809
        %v966 = vunpack.c.h.b16 %v809
        %v967 = vunpack.c.l.b16 %v810
        %v968 = vunpack.c.h.b16 %v810
        %v969 = vunpack.c.l.b16 %v811
        %v970 = vunpack.c.h.b16 %v811
        %v971 = vunpack.c.l.b16 %v812
        %v972 = vunpack.c.h.b16 %v812
        %v973 = vunpack.c.l.b16 %v813
        %v974 = vunpack.c.h.b16 %v813
        %v975 = vunpack.c.l.b16 %v814
        %v976 = vunpack.c.h.b16 %v814
        %v977 = vunpack.c.l.b16 %v815
        %v978 = vunpack.c.h.b16 %v815
        %v979 = vunpack.c.l.b16 %v816
        %v980 = vunpack.c.h.b16 %v816
        %v981 = vunpack.c.l.b16 %v817
        %v982 = vunpack.c.h.b16 %v817
        %v983 = vunpack.c.l.b16 %v818
        %v984 = vunpack.c.h.b16 %v818
        %v985 = vunpack.c.l.b16 %v819
        %v986 = vunpack.c.h.b16 %v819
        %v987 = vunpack.c.l.b16 %v820
        %v988 = vunpack.c.h.b16 %v820
        %v989 = vunpack.c.l.b16 %v821
        %v990 = vunpack.c.h.b16 %v821
        %v991 = vunpack.c.l.b16 %v822
        %v992 = vunpack.c.h.b16 %v822
        %v993 = vunpack.c.l.b16 %v823
        %v994 = vunpack.c.h.b16 %v823
        %v995 = vunpack.c.l.b16 %v824
        %v996 = vunpack.c.h.b16 %v824
        %v997 = vunpack.c.l.b16 %v825
        %v998 = vunpack.c.h.b16 %v825
        %v999 = vunpack.c.l.b16 %v826
        %v1000 = vunpack.c.h.b16 %v826
        %v1001 = vunpack.c.l.b16 %v827
        %v1002 = vunpack.c.h.b16 %v827
        %v1003 = vunpack.c.l.b16 %v828
        %v1004 = vunpack.c.h.b16 %v828
        %v1005 = vunpack.c.l.b16 %v829
        %v1006 = vunpack.c.h.b16 %v829
        %v1007 = vunpack.c.l.b16 %v830
        %v1008 = vunpack.c.h.b16 %v830
        %v1009 = vunpack.c.l.b16 %v831
        %v1010 = vunpack.c.h.b16 %v831
        %v1011 = vunpack.c.l.b16 %v832
        %v1012 = vunpack.c.h.b16 %v832
        %v1013 = vunpack.c.l.b16 %v833
        %v1014 = vunpack.c.h.b16 %v833
        %v1015 = vunpack.c.l.b16 %v834
        %v1016 = vunpack.c.h.b16 %v834
        %v1017 = vunpack.c.l.b16 %v835
        %v1018 = vunpack.c.h.b16 %v835
        %v1019 = vunpack.c.l.b16 %v836
        %v1020 = vunpack.c.h.b16 %v836
        %v1021 = vunpack.c.l.b16 %v837
        %v1022 = vunpack.c.h.b16 %v837
        %v1023 = vunpack.c.l.b16 %v838
        %v1024 = vunpack.c.h.b16 %v838
        %v1025 = vunpack.c.l.b16 %v839
        %v1026 = vunpack.c.h.b16 %v839
        %v1027 = vunpack.c.l.b16 %v840
        %v1028 = vunpack.c.h.b16 %v840
        %v1029 = vunpack.c.l.b16 %v841
        %v1030 = vunpack.c.h.b16 %v841
        %v1031 = vunpack.c.l.b16 %v842
        %v1032 = vunpack.c.h.b16 %v842
        %v1033 = vunpack.c.l.b16 %v843
        %v1034 = vunpack.c.h.b16 %v843
        %v1035 = vunpack.c.l.b16 %v844
        %v1036 = vunpack.c.h.b16 %v844
        %v1037 = vunpack.c.l.b16 %v845
        %v1038 = vunpack.c.h.b16 %v845
        %v1039 = vunpack.c.l.b16 %v846
        %v1040 = vunpack.c.h.b16 %v846
        %v1041 = vunpack.c.l.b16 %v847
        %v1042 = vunpack.c.h.b16 %v847
        %v1043 = vunpack.c.l.b16 %v848
        %v1044 = vunpack.c.h.b16 %v848
        %v1045 = vunpack.c.l.b16 %v849
        %v1046 = vunpack.c.h.b16 %v849
        %v1047 = vunpack.c.l.b16 %v850
        %v1048 = vunpack.c.h.b16 %v850
        %v1049 = vpack.c.b16 %v923, %v921
        %v1050 = vpack.c.b16 %v924, %v922
        %v1051 = vpack.c.b16 %v927, %v925
        %v1052 = vpack.c.b16 %v928, %v926
        %v1053 = vpack.c.b16 %v931, %v929
        %v1054 = vpack.c.b16 %v932, %v930
        %v1055 = vpack.c.b16 %v935, %v933
        %v1056 = vpack.c.b16 %v936, %v934
        %v1057 = vpack.c.b16 %v939, %v937
        %v1058 = vpack.c.b16 %v940, %v938
        %v1059 = vpack.c.b16 %v943, %v941
        %v1060 = vpack.c.b16 %v944, %v942
        %v1061 = vpack.c.b16 %v947, %v945
        %v1062 = vpack.c.b16 %v948, %v946
        %v1063 = vpack.c.b16 %v951, %v949
        %v1064 = vpack.c.b16 %v952, %v950
        %v1065 = vpack.c.b16 %v955, %v953
        %v1066 = vpack.c.b16 %v956, %v954
        %v1067 = vpack.c.b16 %v959, %v957
        %v1068 = vpack.c.b16 %v960, %v958
        %v1069 = vpack.c.b16 %v963, %v961
        %v1070 = vpack.c.b16 %v964, %v962
        %v1071 = vpack.c.b16 %v967, %v965
        %v1072 = vpack.c.b16 %v968, %v966
        %v1073 = vpack.c.b16 %v971, %v969
        %v1074 = vpack.c.b16 %v972, %v970
        %v1075 = vpack.c.b16 %v975, %v973
        %v1076 = vpack.c.b16 %v976, %v974
        %v1077 = vpack.c.b16 %v979, %v977
        %v1078 = vpack.c.b16 %v980, %v978
        %v1079 = vpack.c.b16 %v983, %v981
        %v1080 = vpack.c.b16 %v984, %v982
        %v1081 = vpack.c.b16 %v987, %v985
        %v1082 = vpack.c.b16 %v988, %v986
        %v1083 = vpack.c.b16 %v991, %v989
        %v1084 = vpack.c.b16 %v992, %v990
        %v1085 = vpack.c.b16 %v995, %v993
        %v1086 = vpack.c.b16 %v996, %v994
        %v1087 = vpack.c.b16 %v999, %v997
        %v1088 = vpack.c.b16 %v1000, %v998
        %v1089 = vpack.c.b16 %v1003, %v1001
        %v1090 = vpack.c.b16 %v1004, %v1002
        %v1091 = vpack.c.b16 %v1007, %v1005
        %v1092 = vpack.c.b16 %v1008, %v1006
        %v1093 = vpack.c.b16 %v1011, %v1009
        %v1094 = vpack.c.b16 %v1012, %v1010
        %v1095 = vpack.c.b16 %v1015, %v1013
        %v1096 = vpack.c.b16 %v1016, %v1014
        %v1097 = vpack.c.b16 %v1019, %v1017
        %v1098 = vpack.c.b16 %v1020, %v1018
        %v1099 = vpack.c.b16 %v1023, %v1021
        %v1100 = vpack.c.b16 %v1024, %v1022
        %v1101 = vpack.c.b16 %v1027, %v1025
        %v1102 = vpack.c.b16 %v1028, %v1026
        %v1103 = vpack.c.b16 %v1031, %v1029
        %v1104 = vpack.c.b16 %v1032, %v1030
        %v1105 = vpack.c.b16 %v1035, %v1033
        %v1106 = vpack.c.b16 %v1036, %v1034
        %v1107 = vpack.c.b16 %v1039, %v1037
        %v1108 = vpack.c.b16 %v1040, %v1038
        %v1109 = vpack.c.b16 %v1043, %v1041
        %v1110 = vpack.c.b16 %v1044, %v1042
        %v1111 = vpack.c.b16 %v1047, %v1045
        %v1112 = vpack.c.b16 %v1048, %v1046
        %1177 = vmatpush.bf16.msra.mxu0 %v1063
        %1178 = vmatpush.bf16.msra.mxu0 %v1061
        %1179 = vmatpush.bf16.msra.mxu0 %v1059
        %1180 = vmatpush.bf16.msra.mxu0 %v1057
        %1181 = vmatpush.bf16.msra.mxu0 %v1055
        %1182 = vmatpush.bf16.msra.mxu0 %v1053
        %1183 = vmatpush.bf16.msra.mxu0 %v1051
        %1184 = vmatpush.bf16.msra.mxu0 %v1049
        %1185 = vmatmul.bf16.gmra.mxu0 %v783
        %v1186 = vpop.f32.mrf.mxu0
        %v1187 = vadd.f32 %v853, %v1186
        %v1188 = vpop.f32.mrf.mxu0
        %1189 = vdwg.mxu0
        %1190 = vmatpush.bf16.msra.mxu0 %v1079
        %1191 = vmatpush.bf16.msra.mxu0 %v1077
        %1192 = vmatpush.bf16.msra.mxu0 %v1075
        %1193 = vmatpush.bf16.msra.mxu0 %v1073
        %1194 = vmatpush.bf16.msra.mxu0 %v1071
        %1195 = vmatpush.bf16.msra.mxu0 %v1069
        %1196 = vmatpush.bf16.msra.mxu0 %v1067
        %1197 = vmatpush.bf16.msra.mxu0 %v1065
        %1198 = vmatmul.bf16.gmra.mxu0 %v784
        %v1199 = vpop.f32.mrf.mxu0
        %v1200 = vadd.f32 %v1187, %v1199
        %v1201 = vpop.f32.mrf.mxu0
        %1202 = vdwg.mxu0
        %1203 = vmatpush.bf16.msra.mxu0 %v1095
        %1204 = vmatpush.bf16.msra.mxu0 %v1093
        %1205 = vmatpush.bf16.msra.mxu0 %v1091
        %1206 = vmatpush.bf16.msra.mxu0 %v1089
        %1207 = vmatpush.bf16.msra.mxu0 %v1087
        %1208 = vmatpush.bf16.msra.mxu0 %v1085
        %1209 = vmatpush.bf16.msra.mxu0 %v1083
        %1210 = vmatpush.bf16.msra.mxu0 %v1081
        %1211 = vmatmul.bf16.gmra.mxu0 %v785
        %v1212 = vpop.f32.mrf.mxu0
        %v1213 = vadd.f32 %v1200, %v1212
        %v1214 = vpop.f32.mrf.mxu0
        %1215 = vdwg.mxu0
        %1216 = vmatpush.bf16.msra.mxu0 %v1111
        %1217 = vmatpush.bf16.msra.mxu0 %v1109
        %1218 = vmatpush.bf16.msra.mxu0 %v1107
        %1219 = vmatpush.bf16.msra.mxu0 %v1105
        %1220 = vmatpush.bf16.msra.mxu0 %v1103
        %1221 = vmatpush.bf16.msra.mxu0 %v1101
        %1222 = vmatpush.bf16.msra.mxu0 %v1099
        %1223 = vmatpush.bf16.msra.mxu0 %v1097
        %1224 = vmatmul.bf16.gmra.mxu0 %v786
        %v1225 = vpop.f32.mrf.mxu0
        %v1226 = vadd.f32 %v1213, %v1225
        %v1227 = vpop.f32.mrf.mxu0
        %1228 = vdwg.mxu0
        %1229 = vmatpush.bf16.msra.mxu0 %v1064
        %1230 = vmatpush.bf16.msra.mxu0 %v1062
        %1231 = vmatpush.bf16.msra.mxu0 %v1060
        %1232 = vmatpush.bf16.msra.mxu0 %v1058
        %1233 = vmatpush.bf16.msra.mxu0 %v1056
        %1234 = vmatpush.bf16.msra.mxu0 %v1054
        %1235 = vmatpush.bf16.msra.mxu0 %v1052
        %1236 = vmatpush.bf16.msra.mxu0 %v1050
        %1237 = vmatmul.bf16.gmra.mxu0 %v783
        %v1238 = vpop.f32.mrf.mxu0
        %v1239 = vadd.f32 %v854, %v1238
        %v1240 = vpop.f32.mrf.mxu0
        %1241 = vdwg.mxu0
        %1242 = vmatpush.bf16.msra.mxu0 %v1080
        %1243 = vmatpush.bf16.msra.mxu0 %v1078
        %1244 = vmatpush.bf16.msra.mxu0 %v1076
        %1245 = vmatpush.bf16.msra.mxu0 %v1074
        %1246 = vmatpush.bf16.msra.mxu0 %v1072
        %1247 = vmatpush.bf16.msra.mxu0 %v1070
        %1248 = vmatpush.bf16.msra.mxu0 %v1068
        %1249 = vmatpush.bf16.msra.mxu0 %v1066
        %1250 = vmatmul.bf16.gmra.mxu0 %v784
        %v1251 = vpop.f32.mrf.mxu0
        %v1252 = vadd.f32 %v1239, %v1251
        %v1253 = vpop.f32.mrf.mxu0
        %1254 = vdwg.mxu0
        %1255 = vmatpush.bf16.msra.mxu0 %v1096
        %1256 = vmatpush.bf16.msra.mxu0 %v1094
        %1257 = vmatpush.bf16.msra.mxu0 %v1092
        %1258 = vmatpush.bf16.msra.mxu0 %v1090
        %1259 = vmatpush.bf16.msra.mxu0 %v1088
        %1260 = vmatpush.bf16.msra.mxu0 %v1086
        %1261 = vmatpush.bf16.msra.mxu0 %v1084
        %1262 = vmatpush.bf16.msra.mxu0 %v1082
        %1263 = vmatmul.bf16.gmra.mxu0 %v785
        %v1264 = vpop.f32.mrf.mxu0
        %v1265 = vadd.f32 %v1252, %v1264
        %v1266 = vpop.f32.mrf.mxu0
        %1267 = vdwg.mxu0
        %1268 = vmatpush.bf16.msra.mxu0 %v1112
        %1269 = vmatpush.bf16.msra.mxu0 %v1110
        %1270 = vmatpush.bf16.msra.mxu0 %v1108
        %1271 = vmatpush.bf16.msra.mxu0 %v1106
        %1272 = vmatpush.bf16.msra.mxu0 %v1104
        %1273 = vmatpush.bf16.msra.mxu0 %v1102
        %1274 = vmatpush.bf16.msra.mxu0 %v1100
        %1275 = vmatpush.bf16.msra.mxu0 %v1098
        %1276 = vmatmul.bf16.gmra.mxu0 %v786
        %v1277 = vpop.f32.mrf.mxu0
        %v1278 = vadd.f32 %v1265, %v1277
        %v1279 = vpop.f32.mrf.mxu0
        %1280 = vdwg.mxu0
        %v1281 = vpack.c.bf16 %v1278, %v1278
        %v1282 = vld [vmem:[#allocation12] sm:$0xff]
        %v1283 = vld [vmem:[#allocation12 + $0x8] sm:$0xff]
        %v1284 = vld [vmem:[#allocation12 + $0x10] sm:$0xff]
        %v1285 = vld [vmem:[#allocation12 + $0x18] sm:$0xff]
        %v1286 = vld [vmem:[#allocation12 + $0x20] sm:$0xff]
        %v1287 = vld [vmem:[#allocation12 + $0x28] sm:$0xff]
        %v1288 = vld [vmem:[#allocation12 + $0x30] sm:$0xff]
        %v1289 = vld [vmem:[#allocation12 + $0x38] sm:$0xff]
        %v1290 = vld [vmem:[#allocation12 + $0x40] sm:$0xff]
        %v1291 = vld [vmem:[#allocation12 + $0x48] sm:$0xff]
        %v1292 = vld [vmem:[#allocation12 + $0x50] sm:$0xff]
        %v1293 = vld [vmem:[#allocation12 + $0x58] sm:$0xff]
        %v1294 = vld [vmem:[#allocation12 + $0x60] sm:$0xff]
        %v1295 = vld [vmem:[#allocation12 + $0x68] sm:$0xff]
        %v1296 = vld [vmem:[#allocation12 + $0x70] sm:$0xff]
        %v1297 = vld [vmem:[#allocation12 + $0x78] sm:$0xff]
        %v1298 = vld [vmem:[#allocation12 + $0x80] sm:$0xff]
        %v1299 = vld [vmem:[#allocation12 + $0x88] sm:$0xff]
        %v1300 = vld [vmem:[#allocation12 + $0x90] sm:$0xff]
        %v1301 = vld [vmem:[#allocation12 + $0x98] sm:$0xff]
        %v1302 = vld [vmem:[#allocation12 + $0xa0] sm:$0xff]
        %v1303 = vld [vmem:[#allocation12 + $0xa8] sm:$0xff]
        %v1304 = vld [vmem:[#allocation12 + $0xb0] sm:$0xff]
        %v1305 = vld [vmem:[#allocation12 + $0xb8] sm:$0xff]
        %v1306 = vld [vmem:[#allocation12 + $0xc0] sm:$0xff]
        %v1307 = vld [vmem:[#allocation12 + $0xc8] sm:$0xff]
        %v1308 = vld [vmem:[#allocation12 + $0xd0] sm:$0xff]
        %v1309 = vld [vmem:[#allocation12 + $0xd8] sm:$0xff]
        %v1310 = vld [vmem:[#allocation12 + $0xe0] sm:$0xff]
        %v1311 = vld [vmem:[#allocation12 + $0xe8] sm:$0xff]
        %v1312 = vld [vmem:[#allocation12 + $0xf0] sm:$0xff]
        %v1313 = vld [vmem:[#allocation12 + $0xf8] sm:$0xff]
        %v1314 = vld [vmem:[%s7] sm:$0xf]
        %v1316 = vperm.slane %v1314, 0
        %v1317 = vperm.slane %v1314, 1
        %v1318 = vperm.slane %v1314, 2
        %v1319 = vperm.slane %v1314, 3
        %v1356 = vunpack.c.l.b16 %v1282
        %v1357 = vunpack.c.h.b16 %v1282
        %v1358 = vunpack.c.l.b16 %v1283
        %v1359 = vunpack.c.h.b16 %v1283
        %v1360 = vunpack.c.l.b16 %v1284
        %v1361 = vunpack.c.h.b16 %v1284
        %v1362 = vunpack.c.l.b16 %v1285
        %v1363 = vunpack.c.h.b16 %v1285
        %v1364 = vunpack.c.l.b16 %v1286
        %v1365 = vunpack.c.h.b16 %v1286
        %v1366 = vunpack.c.l.b16 %v1287
        %v1367 = vunpack.c.h.b16 %v1287
        %v1368 = vunpack.c.l.b16 %v1288
        %v1369 = vunpack.c.h.b16 %v1288
        %v1370 = vunpack.c.l.b16 %v1289
        %v1371 = vunpack.c.h.b16 %v1289
        %v1372 = vunpack.c.l.b16 %v1290
        %v1373 = vunpack.c.h.b16 %v1290
        %v1374 = vunpack.c.l.b16 %v1291
        %v1375 = vunpack.c.h.b16 %v1291
        %v1376 = vunpack.c.l.b16 %v1292
        %v1377 = vunpack.c.h.b16 %v1292
        %v1378 = vunpack.c.l.b16 %v1293
        %v1379 = vunpack.c.h.b16 %v1293
        %v1380 = vunpack.c.l.b16 %v1294
        %v1381 = vunpack.c.h.b16 %v1294
        %v1382 = vunpack.c.l.b16 %v1295
        %v1383 = vunpack.c.h.b16 %v1295
        %v1384 = vunpack.c.l.b16 %v1296
        %v1385 = vunpack.c.h.b16 %v1296
        %v1386 = vunpack.c.l.b16 %v1297
        %v1387 = vunpack.c.h.b16 %v1297
        %v1388 = vunpack.c.l.b16 %v1298
        %v1389 = vunpack.c.h.b16 %v1298
        %v1390 = vunpack.c.l.b16 %v1299
        %v1391 = vunpack.c.h.b16 %v1299
        %v1392 = vunpack.c.l.b16 %v1300
        %v1393 = vunpack.c.h.b16 %v1300
        %v1394 = vunpack.c.l.b16 %v1301
        %v1395 = vunpack.c.h.b16 %v1301
        %v1396 = vunpack.c.l.b16 %v1302
        %v1397 = vunpack.c.h.b16 %v1302
        %v1398 = vunpack.c.l.b16 %v1303
        %v1399 = vunpack.c.h.b16 %v1303
        %v1400 = vunpack.c.l.b16 %v1304
        %v1401 = vunpack.c.h.b16 %v1304
        %v1402 = vunpack.c.l.b16 %v1305
        %v1403 = vunpack.c.h.b16 %v1305
        %v1404 = vunpack.c.l.b16 %v1306
        %v1405 = vunpack.c.h.b16 %v1306
        %v1406 = vunpack.c.l.b16 %v1307
        %v1407 = vunpack.c.h.b16 %v1307
        %v1408 = vunpack.c.l.b16 %v1308
        %v1409 = vunpack.c.h.b16 %v1308
        %v1410 = vunpack.c.l.b16 %v1309
        %v1411 = vunpack.c.h.b16 %v1309
        %v1412 = vunpack.c.l.b16 %v1310
        %v1413 = vunpack.c.h.b16 %v1310
        %v1414 = vunpack.c.l.b16 %v1311
        %v1415 = vunpack.c.h.b16 %v1311
        %v1416 = vunpack.c.l.b16 %v1312
        %v1417 = vunpack.c.h.b16 %v1312
        %v1418 = vunpack.c.l.b16 %v1313
        %v1419 = vunpack.c.h.b16 %v1313
        %v1420 = vpack.c.b16 %v1360, %v1356
        %v1421 = vpack.c.b16 %v1361, %v1357
        %v1422 = vpack.c.b16 %v1362, %v1358
        %v1423 = vpack.c.b16 %v1363, %v1359
        %v1424 = vpack.c.b16 %v1368, %v1364
        %v1425 = vpack.c.b16 %v1369, %v1365
        %v1426 = vpack.c.b16 %v1370, %v1366
        %v1427 = vpack.c.b16 %v1371, %v1367
        %v1428 = vpack.c.b16 %v1376, %v1372
        %v1429 = vpack.c.b16 %v1377, %v1373
        %v1430 = vpack.c.b16 %v1378, %v1374
        %v1431 = vpack.c.b16 %v1379, %v1375
        %v1432 = vpack.c.b16 %v1384, %v1380
        %v1433 = vpack.c.b16 %v1385, %v1381
        %v1434 = vpack.c.b16 %v1386, %v1382
        %v1435 = vpack.c.b16 %v1387, %v1383
        %v1436 = vpack.c.b16 %v1392, %v1388
        %v1437 = vpack.c.b16 %v1393, %v1389
        %v1438 = vpack.c.b16 %v1394, %v1390
        %v1439 = vpack.c.b16 %v1395, %v1391
        %v1440 = vpack.c.b16 %v1400, %v1396
        %v1441 = vpack.c.b16 %v1401, %v1397
        %v1442 = vpack.c.b16 %v1402, %v1398
        %v1443 = vpack.c.b16 %v1403, %v1399
        %v1444 = vpack.c.b16 %v1408, %v1404
        %v1445 = vpack.c.b16 %v1409, %v1405
        %v1446 = vpack.c.b16 %v1410, %v1406
        %v1447 = vpack.c.b16 %v1411, %v1407
        %v1448 = vpack.c.b16 %v1416, %v1412
        %v1449 = vpack.c.b16 %v1417, %v1413
        %v1450 = vpack.c.b16 %v1418, %v1414
        %v1451 = vpack.c.b16 %v1419, %v1415
        %1484 = vmatpush.bf16.msra.mxu0 %v1448
        %1485 = vmatpush.bf16.msra.mxu0 %v1444
        %1486 = vmatpush.bf16.msra.mxu0 %v1440
        %1487 = vmatpush.bf16.msra.mxu0 %v1436
        %1488 = vmatpush.bf16.msra.mxu0 %v1432
        %1489 = vmatpush.bf16.msra.mxu0 %v1428
        %1490 = vmatpush.bf16.msra.mxu0 %v1424
        %1491 = vmatpush.bf16.msra.mxu0 %v1420
        %1492 = vmatmul.bf16.gmra.mxu0 %v1281
        %v1493 = vpop.f32.mrf.mxu0
        %v1494 = vadd.f32 %v1316, %v1493
        %v1495 = vpop.f32.mrf.mxu0
        %1496 = vdwg.mxu0
        %1497 = vmatpush.bf16.msra.mxu0 %v1449
        %1498 = vmatpush.bf16.msra.mxu0 %v1445
        %1499 = vmatpush.bf16.msra.mxu0 %v1441
        %1500 = vmatpush.bf16.msra.mxu0 %v1437
        %1501 = vmatpush.bf16.msra.mxu0 %v1433
        %1502 = vmatpush.bf16.msra.mxu0 %v1429
        %1503 = vmatpush.bf16.msra.mxu0 %v1425
        %1504 = vmatpush.bf16.msra.mxu0 %v1421
        %1505 = vmatmul.bf16.gmra.mxu0 %v1281
        %v1506 = vpop.f32.mrf.mxu0
        %v1507 = vadd.f32 %v1317, %v1506
        %v1508 = vpop.f32.mrf.mxu0
        %1509 = vdwg.mxu0
        %1510 = vmatpush.bf16.msra.mxu0 %v1450
        %1511 = vmatpush.bf16.msra.mxu0 %v1446
        %1512 = vmatpush.bf16.msra.mxu0 %v1442
        %1513 = vmatpush.bf16.msra.mxu0 %v1438
        %1514 = vmatpush.bf16.msra.mxu0 %v1434
        %1515 = vmatpush.bf16.msra.mxu0 %v1430
        %1516 = vmatpush.bf16.msra.mxu0 %v1426
        %1517 = vmatpush.bf16.msra.mxu0 %v1422
        %1518 = vmatmul.bf16.gmra.mxu0 %v1281
        %v1519 = vpop.f32.mrf.mxu0
        %v1520 = vadd.f32 %v1318, %v1519
        %v1521 = vpop.f32.mrf.mxu0
        %1522 = vdwg.mxu0
        %1523 = vmatpush.bf16.msra.mxu0 %v1451
        %1524 = vmatpush.bf16.msra.mxu0 %v1447
        %1525 = vmatpush.bf16.msra.mxu0 %v1443
        %1526 = vmatpush.bf16.msra.mxu0 %v1439
        %1527 = vmatpush.bf16.msra.mxu0 %v1435
        %1528 = vmatpush.bf16.msra.mxu0 %v1431
        %1529 = vmatpush.bf16.msra.mxu0 %v1427
        %1530 = vmatpush.bf16.msra.mxu0 %v1423
        %1531 = vmatmul.bf16.gmra.mxu0 %v1281
        %v1532 = vpop.f32.mrf.mxu0
        %v1533 = vadd.f32 %v1319, %v1532
        %v1534 = vpop.f32.mrf.mxu0
        %1535 = vdwg.mxu0
        %v1536 = vld [vmem:[%s445] sm:$0xff]
        %v1538 = vrot.slane %v1536, 1
        %v1539 = vrot.slane %v1536, 2
        %v1540 = vrot.slane %v1536, 3
        %v1541 = vrot.slane %v1536, 4
        %v1542 = vrot.slane %v1536, 5
        %v1543 = vrot.slane %v1536, 6
        %v1544 = vrot.slane %v1536, 7
        %v1545 = vperm.slane %v1536, 0
        %v1546 = vperm.slane %v1538, 0
        %v1547 = vperm.slane %v1539, 0
        %v1548 = vperm.slane %v1540, 0
        %v1549 = vperm.slane %v1541, 0
        %v1550 = vperm.slane %v1542, 0
        %v1551 = vperm.slane %v1543, 0
        %v1552 = vperm.slane %v1544, 0
        %v1561 = vmul.f32 %v1545, %v1226
        %v1562 = vmul.f32 %v1546, %v1226
        %v1563 = vmul.f32 %v1547, %v1226
        %v1564 = vmul.f32 %v1548, %v1226
        %v1565 = vmul.f32 %v1549, %v1226
        %v1566 = vmul.f32 %v1550, %v1226
        %v1567 = vmul.f32 %v1551, %v1226
        %v1568 = vmul.f32 %v1552, %v1226
        %v1569 = vpack.c.bf16 %v1562, %v1561
        %v1570 = vpack.c.bf16 %v1564, %v1563
        %v1571 = vpack.c.bf16 %v1566, %v1565
        %v1572 = vpack.c.bf16 %v1568, %v1567
        %1573 = vmatpush.bf16.msra.mxu0 %v1448
        %1574 = vmatpush.bf16.msra.mxu0 %v1444
        %1575 = vmatpush.bf16.msra.mxu0 %v1440
        %1576 = vmatpush.bf16.msra.mxu0 %v1436
        %1577 = vmatpush.bf16.msra.mxu0 %v1432
        %1578 = vmatpush.bf16.msra.mxu0 %v1428
        %1579 = vmatpush.bf16.msra.mxu0 %v1424
        %1580 = vmatpush.bf16.msra.mxu0 %v1420
        %1581 = vmatmul.bf16.gmra.mxu0 %v1569
        %v1582 = vpop.f32.mrf.mxu0
        %v1583 = vadd.f32 0.0, %v1582
        %v1584 = vpop.f32.mrf.mxu0
        %v1585 = vadd.f32 0.0, %v1584
        %1586 = vmatmul.bf16.gmra.mxu0 %v1570
        %v1587 = vpop.f32.mrf.mxu0
        %v1588 = vadd.f32 0.0, %v1587
        %v1589 = vpop.f32.mrf.mxu0
        %v1590 = vadd.f32 0.0, %v1589
        %1591 = vmatmul.bf16.gmra.mxu0 %v1571
        %v1592 = vpop.f32.mrf.mxu0
        %v1593 = vadd.f32 0.0, %v1592
        %v1594 = vpop.f32.mrf.mxu0
        %v1595 = vadd.f32 0.0, %v1594
        %1596 = vmatmul.bf16.gmra.mxu0 %v1572
        %v1597 = vpop.f32.mrf.mxu0
        %v1598 = vadd.f32 0.0, %v1597
        %v1599 = vpop.f32.mrf.mxu0
        %v1600 = vadd.f32 0.0, %v1599
        %1601 = vdwg.mxu0
        %1602 = vmatpush.bf16.msra.mxu0 %v1449
        %1603 = vmatpush.bf16.msra.mxu0 %v1445
        %1604 = vmatpush.bf16.msra.mxu0 %v1441
        %1605 = vmatpush.bf16.msra.mxu0 %v1437
        %1606 = vmatpush.bf16.msra.mxu0 %v1433
        %1607 = vmatpush.bf16.msra.mxu0 %v1429
        %1608 = vmatpush.bf16.msra.mxu0 %v1425
        %1609 = vmatpush.bf16.msra.mxu0 %v1421
        %1610 = vmatmul.bf16.gmra.mxu0 %v1569
        %v1611 = vpop.f32.mrf.mxu0
        %v1612 = vadd.f32 0.0, %v1611
        %v1613 = vpop.f32.mrf.mxu0
        %v1614 = vadd.f32 0.0, %v1613
        %1615 = vmatmul.bf16.gmra.mxu0 %v1570
        %v1616 = vpop.f32.mrf.mxu0
        %v1617 = vadd.f32 0.0, %v1616
        %v1618 = vpop.f32.mrf.mxu0
        %v1619 = vadd.f32 0.0, %v1618
        %1620 = vmatmul.bf16.gmra.mxu0 %v1571
        %v1621 = vpop.f32.mrf.mxu0
        %v1622 = vadd.f32 0.0, %v1621
        %v1623 = vpop.f32.mrf.mxu0
        %v1624 = vadd.f32 0.0, %v1623
        %1625 = vmatmul.bf16.gmra.mxu0 %v1572
        %v1626 = vpop.f32.mrf.mxu0
        %v1627 = vadd.f32 0.0, %v1626
        %v1628 = vpop.f32.mrf.mxu0
        %v1629 = vadd.f32 0.0, %v1628
        %1630 = vdwg.mxu0
        %1631 = vmatpush.bf16.msra.mxu0 %v1450
        %1632 = vmatpush.bf16.msra.mxu0 %v1446
        %1633 = vmatpush.bf16.msra.mxu0 %v1442
        %1634 = vmatpush.bf16.msra.mxu0 %v1438
        %1635 = vmatpush.bf16.msra.mxu0 %v1434
        %1636 = vmatpush.bf16.msra.mxu0 %v1430
        %1637 = vmatpush.bf16.msra.mxu0 %v1426
        %1638 = vmatpush.bf16.msra.mxu0 %v1422
        %1639 = vmatmul.bf16.gmra.mxu0 %v1569
        %v1640 = vpop.f32.mrf.mxu0
        %v1641 = vadd.f32 0.0, %v1640
        %v1642 = vpop.f32.mrf.mxu0
        %v1643 = vadd.f32 0.0, %v1642
        %1644 = vmatmul.bf16.gmra.mxu0 %v1570
        %v1645 = vpop.f32.mrf.mxu0
        %v1646 = vadd.f32 0.0, %v1645
        %v1647 = vpop.f32.mrf.mxu0
        %v1648 = vadd.f32 0.0, %v1647
        %1649 = vmatmul.bf16.gmra.mxu0 %v1571
        %v1650 = vpop.f32.mrf.mxu0
        %v1651 = vadd.f32 0.0, %v1650
        %v1652 = vpop.f32.mrf.mxu0
        %v1653 = vadd.f32 0.0, %v1652
        %1654 = vmatmul.bf16.gmra.mxu0 %v1572
        %v1655 = vpop.f32.mrf.mxu0
        %v1656 = vadd.f32 0.0, %v1655
        %v1657 = vpop.f32.mrf.mxu0
        %v1658 = vadd.f32 0.0, %v1657
        %1659 = vdwg.mxu0
        %1660 = vmatpush.bf16.msra.mxu0 %v1451
        %1661 = vmatpush.bf16.msra.mxu0 %v1447
        %1662 = vmatpush.bf16.msra.mxu0 %v1443
        %1663 = vmatpush.bf16.msra.mxu0 %v1439
        %1664 = vmatpush.bf16.msra.mxu0 %v1435
        %1665 = vmatpush.bf16.msra.mxu0 %v1431
        %1666 = vmatpush.bf16.msra.mxu0 %v1427
        %1667 = vmatpush.bf16.msra.mxu0 %v1423
        %1668 = vmatmul.bf16.gmra.mxu0 %v1569
        %v1669 = vpop.f32.mrf.mxu0
        %v1670 = vadd.f32 0.0, %v1669
        %v1671 = vpop.f32.mrf.mxu0
        %v1672 = vadd.f32 0.0, %v1671
        %1673 = vmatmul.bf16.gmra.mxu0 %v1570
        %v1674 = vpop.f32.mrf.mxu0
        %v1675 = vadd.f32 0.0, %v1674
        %v1676 = vpop.f32.mrf.mxu0
        %v1677 = vadd.f32 0.0, %v1676
        %1678 = vmatmul.bf16.gmra.mxu0 %v1571
        %v1679 = vpop.f32.mrf.mxu0
        %v1680 = vadd.f32 0.0, %v1679
        %v1681 = vpop.f32.mrf.mxu0
        %v1682 = vadd.f32 0.0, %v1681
        %1683 = vmatmul.bf16.gmra.mxu0 %v1572
        %v1684 = vpop.f32.mrf.mxu0
        %v1685 = vadd.f32 0.0, %v1684
        %v1686 = vpop.f32.mrf.mxu0
        %v1687 = vadd.f32 0.0, %v1686
        %1688 = vdwg.mxu0
        %v1689 = vadd.f32 %v1583, %v1494
        %v1690 = vadd.f32 %v1612, %v1507
        %v1691 = vadd.f32 %v1641, %v1520
        %v1692 = vadd.f32 %v1670, %v1533
        %v1693 = vadd.f32 %v1585, %v1494
        %v1694 = vadd.f32 %v1614, %v1507
        %v1695 = vadd.f32 %v1643, %v1520
        %v1696 = vadd.f32 %v1672, %v1533
        %v1697 = vadd.f32 %v1588, %v1494
        %v1698 = vadd.f32 %v1617, %v1507
        %v1699 = vadd.f32 %v1646, %v1520
        %v1700 = vadd.f32 %v1675, %v1533
        %v1701 = vadd.f32 %v1590, %v1494
        %v1702 = vadd.f32 %v1619, %v1507
        %v1703 = vadd.f32 %v1648, %v1520
        %v1704 = vadd.f32 %v1677, %v1533
        %v1705 = vadd.f32 %v1593, %v1494
        %v1706 = vadd.f32 %v1622, %v1507
        %v1707 = vadd.f32 %v1651, %v1520
        %v1708 = vadd.f32 %v1680, %v1533
        %v1709 = vadd.f32 %v1595, %v1494
        %v1710 = vadd.f32 %v1624, %v1507
        %v1711 = vadd.f32 %v1653, %v1520
        %v1712 = vadd.f32 %v1682, %v1533
        %v1713 = vadd.f32 %v1598, %v1494
        %v1714 = vadd.f32 %v1627, %v1507
        %v1715 = vadd.f32 %v1656, %v1520
        %v1716 = vadd.f32 %v1685, %v1533
        %v1717 = vadd.f32 %v1600, %v1494
        %v1718 = vadd.f32 %v1629, %v1507
        %v1719 = vadd.f32 %v1658, %v1520
        %v1720 = vadd.f32 %v1687, %v1533
        %v1721 = vmax.f32 %v1689, 0.0
        %v1722 = vmax.f32 %v1690, 0.0
        %v1723 = vmax.f32 %v1691, 0.0
        %v1724 = vmax.f32 %v1692, 0.0
        %v1725 = vmax.f32 %v1693, 0.0
        %v1726 = vmax.f32 %v1694, 0.0
        %v1727 = vmax.f32 %v1695, 0.0
        %v1728 = vmax.f32 %v1696, 0.0
        %v1729 = vmax.f32 %v1697, 0.0
        %v1730 = vmax.f32 %v1698, 0.0
        %v1731 = vmax.f32 %v1699, 0.0
        %v1732 = vmax.f32 %v1700, 0.0
        %v1733 = vmax.f32 %v1701, 0.0
        %v1734 = vmax.f32 %v1702, 0.0
        %v1735 = vmax.f32 %v1703, 0.0
        %v1736 = vmax.f32 %v1704, 0.0
        %v1737 = vmax.f32 %v1705, 0.0
        %v1738 = vmax.f32 %v1706, 0.0
        %v1739 = vmax.f32 %v1707, 0.0
        %v1740 = vmax.f32 %v1708, 0.0
        %v1741 = vmax.f32 %v1709, 0.0
        %v1742 = vmax.f32 %v1710, 0.0
        %v1743 = vmax.f32 %v1711, 0.0
        %v1744 = vmax.f32 %v1712, 0.0
        %v1745 = vmax.f32 %v1713, 0.0
        %v1746 = vmax.f32 %v1714, 0.0
        %v1747 = vmax.f32 %v1715, 0.0
        %v1748 = vmax.f32 %v1716, 0.0
        %v1749 = vmax.f32 %v1717, 0.0
        %v1750 = vmax.f32 %v1718, 0.0
        %v1751 = vmax.f32 %v1719, 0.0
        %v1752 = vmax.f32 %v1720, 0.0
        %v1753 = vrot.slane %v1721, 4
        %v1754 = vadd.f32 %v1721, %v1753
        %v1755 = vrot.slane %v1754, 2
        %v1756 = vadd.f32 %v1754, %v1755
        %v1757 = vrot.slane %v1756, 1
        %v1758 = vadd.f32 %v1756, %v1757
        %v1759 = vrot.slane %v1722, 4
        %v1760 = vadd.f32 %v1722, %v1759
        %v1761 = vrot.slane %v1760, 2
        %v1762 = vadd.f32 %v1760, %v1761
        %v1763 = vrot.slane %v1762, 1
        %v1764 = vadd.f32 %v1762, %v1763
        %v1765 = vrot.slane %v1723, 4
        %v1766 = vadd.f32 %v1723, %v1765
        %v1767 = vrot.slane %v1766, 2
        %v1768 = vadd.f32 %v1766, %v1767
        %v1769 = vrot.slane %v1768, 1
        %v1770 = vadd.f32 %v1768, %v1769
        %v1771 = vrot.slane %v1724, 4
        %v1772 = vadd.f32 %v1724, %v1771
        %v1773 = vrot.slane %v1772, 2
        %v1774 = vadd.f32 %v1772, %v1773
        %v1775 = vrot.slane %v1774, 1
        %v1776 = vadd.f32 %v1774, %v1775
        %v1777 = vrot.slane %v1725, 4
        %v1778 = vadd.f32 %v1725, %v1777
        %v1779 = vrot.slane %v1778, 2
        %v1780 = vadd.f32 %v1778, %v1779
        %v1781 = vrot.slane %v1780, 1
        %v1782 = vadd.f32 %v1780, %v1781
        %v1783 = vrot.slane %v1726, 4
        %v1784 = vadd.f32 %v1726, %v1783
        %v1785 = vrot.slane %v1784, 2
        %v1786 = vadd.f32 %v1784, %v1785
        %v1787 = vrot.slane %v1786, 1
        %v1788 = vadd.f32 %v1786, %v1787
        %v1789 = vrot.slane %v1727, 4
        %v1790 = vadd.f32 %v1727, %v1789
        %v1791 = vrot.slane %v1790, 2
        %v1792 = vadd.f32 %v1790, %v1791
        %v1793 = vrot.slane %v1792, 1
        %v1794 = vadd.f32 %v1792, %v1793
        %v1795 = vrot.slane %v1728, 4
        %v1796 = vadd.f32 %v1728, %v1795
        %v1797 = vrot.slane %v1796, 2
        %v1798 = vadd.f32 %v1796, %v1797
        %v1799 = vrot.slane %v1798, 1
        %v1800 = vadd.f32 %v1798, %v1799
        %v1801 = vrot.slane %v1729, 4
        %v1802 = vadd.f32 %v1729, %v1801
        %v1803 = vrot.slane %v1802, 2
        %v1804 = vadd.f32 %v1802, %v1803
        %v1805 = vrot.slane %v1804, 1
        %v1806 = vadd.f32 %v1804, %v1805
        %v1807 = vrot.slane %v1730, 4
        %v1808 = vadd.f32 %v1730, %v1807
        %v1809 = vrot.slane %v1808, 2
        %v1810 = vadd.f32 %v1808, %v1809
        %v1811 = vrot.slane %v1810, 1
        %v1812 = vadd.f32 %v1810, %v1811
        %v1813 = vrot.slane %v1731, 4
        %v1814 = vadd.f32 %v1731, %v1813
        %v1815 = vrot.slane %v1814, 2
        %v1816 = vadd.f32 %v1814, %v1815
        %v1817 = vrot.slane %v1816, 1
        %v1818 = vadd.f32 %v1816, %v1817
        %v1819 = vrot.slane %v1732, 4
        %v1820 = vadd.f32 %v1732, %v1819
        %v1821 = vrot.slane %v1820, 2
        %v1822 = vadd.f32 %v1820, %v1821
        %v1823 = vrot.slane %v1822, 1
        %v1824 = vadd.f32 %v1822, %v1823
        %v1825 = vrot.slane %v1733, 4
        %v1826 = vadd.f32 %v1733, %v1825
        %v1827 = vrot.slane %v1826, 2
        %v1828 = vadd.f32 %v1826, %v1827
        %v1829 = vrot.slane %v1828, 1
        %v1830 = vadd.f32 %v1828, %v1829
        %v1831 = vrot.slane %v1734, 4
        %v1832 = vadd.f32 %v1734, %v1831
        %v1833 = vrot.slane %v1832, 2
        %v1834 = vadd.f32 %v1832, %v1833
        %v1835 = vrot.slane %v1834, 1
        %v1836 = vadd.f32 %v1834, %v1835
        %v1837 = vrot.slane %v1735, 4
        %v1838 = vadd.f32 %v1735, %v1837
        %v1839 = vrot.slane %v1838, 2
        %v1840 = vadd.f32 %v1838, %v1839
        %v1841 = vrot.slane %v1840, 1
        %v1842 = vadd.f32 %v1840, %v1841
        %v1843 = vrot.slane %v1736, 4
        %v1844 = vadd.f32 %v1736, %v1843
        %v1845 = vrot.slane %v1844, 2
        %v1846 = vadd.f32 %v1844, %v1845
        %v1847 = vrot.slane %v1846, 1
        %v1848 = vadd.f32 %v1846, %v1847
        %v1849 = vrot.slane %v1737, 4
        %v1850 = vadd.f32 %v1737, %v1849
        %v1851 = vrot.slane %v1850, 2
        %v1852 = vadd.f32 %v1850, %v1851
        %v1853 = vrot.slane %v1852, 1
        %v1854 = vadd.f32 %v1852, %v1853
        %v1855 = vrot.slane %v1738, 4
        %v1856 = vadd.f32 %v1738, %v1855
        %v1857 = vrot.slane %v1856, 2
        %v1858 = vadd.f32 %v1856, %v1857
        %v1859 = vrot.slane %v1858, 1
        %v1860 = vadd.f32 %v1858, %v1859
        %v1861 = vrot.slane %v1739, 4
        %v1862 = vadd.f32 %v1739, %v1861
        %v1863 = vrot.slane %v1862, 2
        %v1864 = vadd.f32 %v1862, %v1863
        %v1865 = vrot.slane %v1864, 1
        %v1866 = vadd.f32 %v1864, %v1865
        %v1867 = vrot.slane %v1740, 4
        %v1868 = vadd.f32 %v1740, %v1867
        %v1869 = vrot.slane %v1868, 2
        %v1870 = vadd.f32 %v1868, %v1869
        %v1871 = vrot.slane %v1870, 1
        %v1872 = vadd.f32 %v1870, %v1871
        %v1873 = vrot.slane %v1741, 4
        %v1874 = vadd.f32 %v1741, %v1873
        %v1875 = vrot.slane %v1874, 2
        %v1876 = vadd.f32 %v1874, %v1875
        %v1877 = vrot.slane %v1876, 1
        %v1878 = vadd.f32 %v1876, %v1877
        %v1879 = vrot.slane %v1742, 4
        %v1880 = vadd.f32 %v1742, %v1879
        %v1881 = vrot.slane %v1880, 2
        %v1882 = vadd.f32 %v1880, %v1881
        %v1883 = vrot.slane %v1882, 1
        %v1884 = vadd.f32 %v1882, %v1883
        %v1885 = vrot.slane %v1743, 4
        %v1886 = vadd.f32 %v1743, %v1885
        %v1887 = vrot.slane %v1886, 2
        %v1888 = vadd.f32 %v1886, %v1887
        %v1889 = vrot.slane %v1888, 1
        %v1890 = vadd.f32 %v1888, %v1889
        %v1891 = vrot.slane %v1744, 4
        %v1892 = vadd.f32 %v1744, %v1891
        %v1893 = vrot.slane %v1892, 2
        %v1894 = vadd.f32 %v1892, %v1893
        %v1895 = vrot.slane %v1894, 1
        %v1896 = vadd.f32 %v1894, %v1895
        %v1897 = vrot.slane %v1745, 4
        %v1898 = vadd.f32 %v1745, %v1897
        %v1899 = vrot.slane %v1898, 2
        %v1900 = vadd.f32 %v1898, %v1899
        %v1901 = vrot.slane %v1900, 1
        %v1902 = vadd.f32 %v1900, %v1901
        %v1903 = vrot.slane %v1746, 4
        %v1904 = vadd.f32 %v1746, %v1903
        %v1905 = vrot.slane %v1904, 2
        %v1906 = vadd.f32 %v1904, %v1905
        %v1907 = vrot.slane %v1906, 1
        %v1908 = vadd.f32 %v1906, %v1907
        %v1909 = vrot.slane %v1747, 4
        %v1910 = vadd.f32 %v1747, %v1909
        %v1911 = vrot.slane %v1910, 2
        %v1912 = vadd.f32 %v1910, %v1911
        %v1913 = vrot.slane %v1912, 1
        %v1914 = vadd.f32 %v1912, %v1913
        %v1915 = vrot.slane %v1748, 4
        %v1916 = vadd.f32 %v1748, %v1915
        %v1917 = vrot.slane %v1916, 2
        %v1918 = vadd.f32 %v1916, %v1917
        %v1919 = vrot.slane %v1918, 1
        %v1920 = vadd.f32 %v1918, %v1919
        %v1921 = vrot.slane %v1749, 4
        %v1922 = vadd.f32 %v1749, %v1921
        %v1923 = vrot.slane %v1922, 2
        %v1924 = vadd.f32 %v1922, %v1923
        %v1925 = vrot.slane %v1924, 1
        %v1926 = vadd.f32 %v1924, %v1925
        %v1927 = vrot.slane %v1750, 4
        %v1928 = vadd.f32 %v1750, %v1927
        %v1929 = vrot.slane %v1928, 2
        %v1930 = vadd.f32 %v1928, %v1929
        %v1931 = vrot.slane %v1930, 1
        %v1932 = vadd.f32 %v1930, %v1931
        %v1933 = vrot.slane %v1751, 4
        %v1934 = vadd.f32 %v1751, %v1933
        %v1935 = vrot.slane %v1934, 2
        %v1936 = vadd.f32 %v1934, %v1935
        %v1937 = vrot.slane %v1936, 1
        %v1938 = vadd.f32 %v1936, %v1937
        %v1939 = vrot.slane %v1752, 4
        %v1940 = vadd.f32 %v1752, %v1939
        %v1941 = vrot.slane %v1940, 2
        %v1942 = vadd.f32 %v1940, %v1941
        %v1943 = vrot.slane %v1942, 1
        %v1944 = vadd.f32 %v1942, %v1943
        %p1945 = scmp.eq.s32.totalorder %s39, 0
        // Predicated region
        $region89: #{tpu_custom_call.1} parent=59 // pred_check
          %p1946 = pneg %p1945
        $region90: #{tpu_custom_call.1} parent=59 // pred_check_branch
          %1948 = sbr.rel (%p1946) target = $region92
        $region91: #{tpu_custom_call.1} parent=59 // pred_region
          %1949 = vst [vmem:[#allocation2] sm:$0xff] 0.0
          %1950 = vst [vmem:[#allocation2 + $0x8] sm:$0xff] 0.0
          %1951 = vst [vmem:[#allocation2 + $0x10] sm:$0xff] 0.0
          %1952 = vst [vmem:[#allocation2 + $0x18] sm:$0xff] 0.0
        $region92: #{tpu_custom_call.1} parent=59 // pred_fallthru
          _
        %v1953 = vld [vmem:[#allocation2] sm:$0xff]
        %v1954 = vld [vmem:[#allocation2 + $0x8] sm:$0xff]
        %v1955 = vld [vmem:[#allocation2 + $0x10] sm:$0xff]
        %v1956 = vld [vmem:[#allocation2 + $0x18] sm:$0xff]
        %vm1989 = vcmask 1041409
        %v1990 = vsel %vm1989, %v1782, %v1758
        %vm1991 = vcmask 1042434
        %v1992 = vsel %vm1991, %v1806, %v1990
        %vm1993 = vcmask 1043459
        %v1994 = vsel %vm1993, %v1830, %v1992
        %vm1995 = vcmask 1044484
        %v1996 = vsel %vm1995, %v1854, %v1994
        %vm1997 = vcmask 1045509
        %v1998 = vsel %vm1997, %v1878, %v1996
        %vm1999 = vcmask 1046534
        %v2000 = vsel %vm1999, %v1902, %v1998
        %vm2001 = vcmask 1047559
        %v2002 = vsel %vm2001, %v1926, %v2000
        %v2003 = vsel %vm1989, %v1788, %v1764
        %v2004 = vsel %vm1991, %v1812, %v2003
        %v2005 = vsel %vm1993, %v1836, %v2004
        %v2006 = vsel %vm1995, %v1860, %v2005
        %v2007 = vsel %vm1997, %v1884, %v2006
        %v2008 = vsel %vm1999, %v1908, %v2007
        %v2009 = vsel %vm2001, %v1932, %v2008
        %v2010 = vsel %vm1989, %v1794, %v1770
        %v2011 = vsel %vm1991, %v1818, %v2010
        %v2012 = vsel %vm1993, %v1842, %v2011
        %v2013 = vsel %vm1995, %v1866, %v2012
        %v2014 = vsel %vm1997, %v1890, %v2013
        %v2015 = vsel %vm1999, %v1914, %v2014
        %v2016 = vsel %vm2001, %v1938, %v2015
        %v2017 = vsel %vm1989, %v1800, %v1776
        %v2018 = vsel %vm1991, %v1824, %v2017
        %v2019 = vsel %vm1993, %v1848, %v2018
        %v2020 = vsel %vm1995, %v1872, %v2019
        %v2021 = vsel %vm1997, %v1896, %v2020
        %v2022 = vsel %vm1999, %v1920, %v2021
        %v2023 = vsel %vm2001, %v1944, %v2022
        %v2028 = vadd.f32 %v1953, %v2002
        %v2029 = vadd.f32 %v1954, %v2009
        %v2030 = vadd.f32 %v1955, %v2016
        %v2031 = vadd.f32 %v1956, %v2023
        %2032 = vst [vmem:[#allocation2] sm:$0xff] %v2028
        %2033 = vst [vmem:[#allocation2 + $0x8] sm:$0xff] %v2029
        %2034 = vst [vmem:[#allocation2 + $0x10] sm:$0xff] %v2030
        %2035 = vst [vmem:[#allocation2 + $0x18] sm:$0xff] %v2031
        // Predicated region
        $region93: #{tpu_custom_call.1} parent=59 // pred_check
          %p2036 = pneg %p1945
        $region94: #{tpu_custom_call.1} parent=59 // pred_check_branch
          %2038 = sbr.rel (%p2036) target = $region96
        $region95: #{tpu_custom_call.1} parent=59 // pred_region
          %v2039 = vld [vmem:[#allocation2] sm:$0xff]
          %v2040 = vld [vmem:[#allocation2 + $0x8] sm:$0xff]
          %v2041 = vld [vmem:[#allocation2 + $0x10] sm:$0xff]
          %v2042 = vld [vmem:[#allocation2 + $0x18] sm:$0xff]
          %v2043 = vmul.f32 %v2039, 0.125
          %v2044 = vmul.f32 %v2040, 0.125
          %v2045 = vmul.f32 %v2041, 0.125
          %v2046 = vmul.f32 %v2042, 0.125
          %v2047 = vpack.c.bf16 %v2043, %v2043
          %v2048 = vpack.c.bf16 %v2044, %v2044
          %v2049 = vpack.c.bf16 %v2045, %v2045
          %v2050 = vpack.c.bf16 %v2046, %v2046
          %v2051 = vld [vmem:[#allocation14] sm:$0xf]
          %v2052 = vld [vmem:[#allocation14 + $0x4] sm:$0xf]
          %v2053 = vld [vmem:[#allocation14 + $0x8] sm:$0xf]
          %v2054 = vld [vmem:[#allocation14 + $0xc] sm:$0xf]
          %v2055 = vld [vmem:[#allocation14 + $0x10] sm:$0xf]
          %v2056 = vld [vmem:[#allocation14 + $0x14] sm:$0xf]
          %v2057 = vld [vmem:[#allocation14 + $0x18] sm:$0xf]
          %v2058 = vld [vmem:[#allocation14 + $0x1c] sm:$0xf]
          %v2059 = vld [vmem:[#allocation14 + $0x20] sm:$0xf]
          %v2060 = vld [vmem:[#allocation14 + $0x24] sm:$0xf]
          %v2061 = vld [vmem:[#allocation14 + $0x28] sm:$0xf]
          %v2062 = vld [vmem:[#allocation14 + $0x2c] sm:$0xf]
          %v2063 = vld [vmem:[#allocation14 + $0x30] sm:$0xf]
          %v2064 = vld [vmem:[#allocation14 + $0x34] sm:$0xf]
          %v2065 = vld [vmem:[#allocation14 + $0x38] sm:$0xf]
          %v2066 = vld [vmem:[#allocation14 + $0x3c] sm:$0xf]
          %v2067 = vld [vmem:[#allocation14 + $0x40] sm:$0xf]
          %v2068 = vld [vmem:[#allocation14 + $0x44] sm:$0xf]
          %v2069 = vld [vmem:[#allocation14 + $0x48] sm:$0xf]
          %v2070 = vld [vmem:[#allocation14 + $0x4c] sm:$0xf]
          %v2071 = vld [vmem:[#allocation14 + $0x50] sm:$0xf]
          %v2072 = vld [vmem:[#allocation14 + $0x54] sm:$0xf]
          %v2073 = vld [vmem:[#allocation14 + $0x58] sm:$0xf]
          %v2074 = vld [vmem:[#allocation14 + $0x5c] sm:$0xf]
          %v2075 = vld [vmem:[#allocation14 + $0x60] sm:$0xf]
          %v2076 = vld [vmem:[#allocation14 + $0x64] sm:$0xf]
          %v2077 = vld [vmem:[#allocation14 + $0x68] sm:$0xf]
          %v2078 = vld [vmem:[#allocation14 + $0x6c] sm:$0xf]
          %v2079 = vld [vmem:[#allocation14 + $0x70] sm:$0xf]
          %v2080 = vld [vmem:[#allocation14 + $0x74] sm:$0xf]
          %v2081 = vld [vmem:[#allocation14 + $0x78] sm:$0xf]
          %v2082 = vld [vmem:[#allocation14 + $0x7c] sm:$0xf]
          %v2083 = vld [vmem:[#allocation14 + $0x80] sm:$0xf]
          %v2084 = vld [vmem:[#allocation14 + $0x84] sm:$0xf]
          %v2085 = vld [vmem:[#allocation14 + $0x88] sm:$0xf]
          %v2086 = vld [vmem:[#allocation14 + $0x8c] sm:$0xf]
          %v2087 = vld [vmem:[#allocation14 + $0x90] sm:$0xf]
          %v2088 = vld [vmem:[#allocation14 + $0x94] sm:$0xf]
          %v2089 = vld [vmem:[#allocation14 + $0x98] sm:$0xf]
          %v2090 = vld [vmem:[#allocation14 + $0x9c] sm:$0xf]
          %v2091 = vld [vmem:[#allocation14 + $0xa0] sm:$0xf]
          %v2092 = vld [vmem:[#allocation14 + $0xa4] sm:$0xf]
          %v2093 = vld [vmem:[#allocation14 + $0xa8] sm:$0xf]
          %v2094 = vld [vmem:[#allocation14 + $0xac] sm:$0xf]
          %v2095 = vld [vmem:[#allocation14 + $0xb0] sm:$0xf]
          %v2096 = vld [vmem:[#allocation14 + $0xb4] sm:$0xf]
          %v2097 = vld [vmem:[#allocation14 + $0xb8] sm:$0xf]
          %v2098 = vld [vmem:[#allocation14 + $0xbc] sm:$0xf]
          %v2099 = vld [vmem:[#allocation14 + $0xc0] sm:$0xf]
          %v2100 = vld [vmem:[#allocation14 + $0xc4] sm:$0xf]
          %v2101 = vld [vmem:[#allocation14 + $0xc8] sm:$0xf]
          %v2102 = vld [vmem:[#allocation14 + $0xcc] sm:$0xf]
          %v2103 = vld [vmem:[#allocation14 + $0xd0] sm:$0xf]
          %v2104 = vld [vmem:[#allocation14 + $0xd4] sm:$0xf]
          %v2105 = vld [vmem:[#allocation14 + $0xd8] sm:$0xf]
          %v2106 = vld [vmem:[#allocation14 + $0xdc] sm:$0xf]
          %v2107 = vld [vmem:[#allocation14 + $0xe0] sm:$0xf]
          %v2108 = vld [vmem:[#allocation14 + $0xe4] sm:$0xf]
          %v2109 = vld [vmem:[#allocation14 + $0xe8] sm:$0xf]
          %v2110 = vld [vmem:[#allocation14 + $0xec] sm:$0xf]
          %v2111 = vld [vmem:[#allocation14 + $0xf0] sm:$0xf]
          %v2112 = vld [vmem:[#allocation14 + $0xf4] sm:$0xf]
          %v2113 = vld [vmem:[#allocation14 + $0xf8] sm:$0xf]
          %v2114 = vld [vmem:[#allocation14 + $0xfc] sm:$0xf]
          %v2115 = vld [vmem:[%s9] sm:$0x1]
          %v2117 = vperm.slane %v2115, 0
          %v2183 = vunpack.c.l.b16 %v2051
          %v2184 = vunpack.c.l.b16 %v2052
          %v2185 = vunpack.c.l.b16 %v2053
          %v2186 = vunpack.c.l.b16 %v2054
          %v2187 = vunpack.c.l.b16 %v2055
          %v2188 = vunpack.c.l.b16 %v2056
          %v2189 = vunpack.c.l.b16 %v2057
          %v2190 = vunpack.c.l.b16 %v2058
          %v2191 = vunpack.c.l.b16 %v2059
          %v2192 = vunpack.c.l.b16 %v2060
          %v2193 = vunpack.c.l.b16 %v2061
          %v2194 = vunpack.c.l.b16 %v2062
          %v2195 = vunpack.c.l.b16 %v2063
          %v2196 = vunpack.c.l.b16 %v2064
          %v2197 = vunpack.c.l.b16 %v2065
          %v2198 = vunpack.c.l.b16 %v2066
          %v2199 = vunpack.c.l.b16 %v2067
          %v2200 = vunpack.c.l.b16 %v2068
          %v2201 = vunpack.c.l.b16 %v2069
          %v2202 = vunpack.c.l.b16 %v2070
          %v2203 = vunpack.c.l.b16 %v2071
          %v2204 = vunpack.c.l.b16 %v2072
          %v2205 = vunpack.c.l.b16 %v2073
          %v2206 = vunpack.c.l.b16 %v2074
          %v2207 = vunpack.c.l.b16 %v2075
          %v2208 = vunpack.c.l.b16 %v2076
          %v2209 = vunpack.c.l.b16 %v2077
          %v2210 = vunpack.c.l.b16 %v2078
          %v2211 = vunpack.c.l.b16 %v2079
          %v2212 = vunpack.c.l.b16 %v2080
          %v2213 = vunpack.c.l.b16 %v2081
          %v2214 = vunpack.c.l.b16 %v2082
          %v2215 = vunpack.c.l.b16 %v2083
          %v2216 = vunpack.c.l.b16 %v2084
          %v2217 = vunpack.c.l.b16 %v2085
          %v2218 = vunpack.c.l.b16 %v2086
          %v2219 = vunpack.c.l.b16 %v2087
          %v2220 = vunpack.c.l.b16 %v2088
          %v2221 = vunpack.c.l.b16 %v2089
          %v2222 = vunpack.c.l.b16 %v2090
          %v2223 = vunpack.c.l.b16 %v2091
          %v2224 = vunpack.c.l.b16 %v2092
          %v2225 = vunpack.c.l.b16 %v2093
          %v2226 = vunpack.c.l.b16 %v2094
          %v2227 = vunpack.c.l.b16 %v2095
          %v2228 = vunpack.c.l.b16 %v2096
          %v2229 = vunpack.c.l.b16 %v2097
          %v2230 = vunpack.c.l.b16 %v2098
          %v2231 = vunpack.c.l.b16 %v2099
          %v2232 = vunpack.c.l.b16 %v2100
          %v2233 = vunpack.c.l.b16 %v2101
          %v2234 = vunpack.c.l.b16 %v2102
          %v2235 = vunpack.c.l.b16 %v2103
          %v2236 = vunpack.c.l.b16 %v2104
          %v2237 = vunpack.c.l.b16 %v2105
          %v2238 = vunpack.c.l.b16 %v2106
          %v2239 = vunpack.c.l.b16 %v2107
          %v2240 = vunpack.c.l.b16 %v2108
          %v2241 = vunpack.c.l.b16 %v2109
          %v2242 = vunpack.c.l.b16 %v2110
          %v2243 = vunpack.c.l.b16 %v2111
          %v2244 = vunpack.c.l.b16 %v2112
          %v2245 = vunpack.c.l.b16 %v2113
          %v2246 = vunpack.c.l.b16 %v2114
          %v2247 = vpack.c.b16 %v2184, %v2183
          %v2248 = vpack.c.b16 %v2186, %v2185
          %v2249 = vpack.c.b16 %v2188, %v2187
          %v2250 = vpack.c.b16 %v2190, %v2189
          %v2251 = vpack.c.b16 %v2192, %v2191
          %v2252 = vpack.c.b16 %v2194, %v2193
          %v2253 = vpack.c.b16 %v2196, %v2195
          %v2254 = vpack.c.b16 %v2198, %v2197
          %v2255 = vpack.c.b16 %v2200, %v2199
          %v2256 = vpack.c.b16 %v2202, %v2201
          %v2257 = vpack.c.b16 %v2204, %v2203
          %v2258 = vpack.c.b16 %v2206, %v2205
          %v2259 = vpack.c.b16 %v2208, %v2207
          %v2260 = vpack.c.b16 %v2210, %v2209
          %v2261 = vpack.c.b16 %v2212, %v2211
          %v2262 = vpack.c.b16 %v2214, %v2213
          %v2263 = vpack.c.b16 %v2216, %v2215
          %v2264 = vpack.c.b16 %v2218, %v2217
          %v2265 = vpack.c.b16 %v2220, %v2219
          %v2266 = vpack.c.b16 %v2222, %v2221
          %v2267 = vpack.c.b16 %v2224, %v2223
          %v2268 = vpack.c.b16 %v2226, %v2225
          %v2269 = vpack.c.b16 %v2228, %v2227
          %v2270 = vpack.c.b16 %v2230, %v2229
          %v2271 = vpack.c.b16 %v2232, %v2231
          %v2272 = vpack.c.b16 %v2234, %v2233
          %v2273 = vpack.c.b16 %v2236, %v2235
          %v2274 = vpack.c.b16 %v2238, %v2237
          %v2275 = vpack.c.b16 %v2240, %v2239
          %v2276 = vpack.c.b16 %v2242, %v2241
          %v2277 = vpack.c.b16 %v2244, %v2243
          %v2278 = vpack.c.b16 %v2246, %v2245
          %2311 = vmatpush.bf16.msra.mxu0 %v2254
          %2312 = vmatpush.bf16.msra.mxu0 %v2253
          %2313 = vmatpush.bf16.msra.mxu0 %v2252
          %2314 = vmatpush.bf16.msra.mxu0 %v2251
          %2315 = vmatpush.bf16.msra.mxu0 %v2250
          %2316 = vmatpush.bf16.msra.mxu0 %v2249
          %2317 = vmatpush.bf16.msra.mxu0 %v2248
          %2318 = vmatpush.bf16.msra.mxu0 %v2247
          %2319 = vmatmul.bf16.gmra.mxu0 %v2047
          %v2320 = vpop.f32.mrf.mxu0
          %v2321 = vadd.f32 %v2117, %v2320
          %v2322 = vpop.f32.mrf.mxu0
          %2323 = vdwg.mxu0
          %2324 = vmatpush.bf16.msra.mxu0 %v2262
          %2325 = vmatpush.bf16.msra.mxu0 %v2261
          %2326 = vmatpush.bf16.msra.mxu0 %v2260
          %2327 = vmatpush.bf16.msra.mxu0 %v2259
          %2328 = vmatpush.bf16.msra.mxu0 %v2258
          %2329 = vmatpush.bf16.msra.mxu0 %v2257
          %2330 = vmatpush.bf16.msra.mxu0 %v2256
          %2331 = vmatpush.bf16.msra.mxu0 %v2255
          %2332 = vmatmul.bf16.gmra.mxu0 %v2048
          %v2333 = vpop.f32.mrf.mxu0
          %v2334 = vadd.f32 %v2321, %v2333
          %v2335 = vpop.f32.mrf.mxu0
          %2336 = vdwg.mxu0
          %2337 = vmatpush.bf16.msra.mxu0 %v2270
          %2338 = vmatpush.bf16.msra.mxu0 %v2269
          %2339 = vmatpush.bf16.msra.mxu0 %v2268
          %2340 = vmatpush.bf16.msra.mxu0 %v2267
          %2341 = vmatpush.bf16.msra.mxu0 %v2266
          %2342 = vmatpush.bf16.msra.mxu0 %v2265
          %2343 = vmatpush.bf16.msra.mxu0 %v2264
          %2344 = vmatpush.bf16.msra.mxu0 %v2263
          %2345 = vmatmul.bf16.gmra.mxu0 %v2049
          %v2346 = vpop.f32.mrf.mxu0
          %v2347 = vadd.f32 %v2334, %v2346
          %v2348 = vpop.f32.mrf.mxu0
          %2349 = vdwg.mxu0
          %2350 = vmatpush.bf16.msra.mxu0 %v2278
          %2351 = vmatpush.bf16.msra.mxu0 %v2277
          %2352 = vmatpush.bf16.msra.mxu0 %v2276
          %2353 = vmatpush.bf16.msra.mxu0 %v2275
          %2354 = vmatpush.bf16.msra.mxu0 %v2274
          %2355 = vmatpush.bf16.msra.mxu0 %v2273
          %2356 = vmatpush.bf16.msra.mxu0 %v2272
          %2357 = vmatpush.bf16.msra.mxu0 %v2271
          %2358 = vmatmul.bf16.gmra.mxu0 %v2050
          %v2359 = vpop.f32.mrf.mxu0
          %v2360 = vadd.f32 %v2347, %v2359
          %v2361 = vpop.f32.mrf.mxu0
          %2362 = vdwg.mxu0
          %2363 = vst [vmem:[%s522] sm:$0xff] %v2360
        $region96: #{tpu_custom_call.1} parent=59 // pred_fallthru
          _
        %s2364 = sand.u32 %s285, 1
        %s2365 = scalar_lea.sflag [#allocation5], %s2364
        %s2366 = sand.u32 %s285, 1
        %s2367 = smul.addr %s2366, 8
        %s2368 = scalar_lea.vmem [#allocation15], %s2367
        // Predicated region
        $region97: #{tpu_custom_call.1} parent=59 // pred_check
          %p2369 = pneg %p295
        $region98: #{tpu_custom_call.1} parent=59 // pred_check_branch
          %2371 = sbr.rel (%p2369) target = $region100
        $region99: #{tpu_custom_call.1} parent=59 // pred_region
          %2373 = vsyncadd %s2365, 0
          %s2374 = sadd.s32 %s38, %s37
          %s2375 = smul.addr %s2374, 8
          %s2376 = scalar_lea.hbm %s10, %s2375
          %s2378 = sshll.u32 %s2368, 4
          %s2379 = int_to_ptr.vmem [resolvable:$true] %s2378
          %s2380 = sshll.u32 %s2376, 4
          %s2381 = int_to_ptr.hbm [resolvable:$true] %s2380
          %2383 = dma.vmem_to_hbm [thread:$0]  %s2379, 128, %s2381, %s2365
        $region100: #{tpu_custom_call.1} parent=59 // pred_fallthru
          _
      $region60: #{tpu_custom_call.1} parent=5 // pred_fallthru
        _
      %p2384 = scmp.le.s32.totalorder 2, %s27
      // Predicated region
      $region101: #{tpu_custom_call.1} parent=5 // pred_check
        %p2385 = pneg %p2384
      $region102: #{tpu_custom_call.1} parent=5 // pred_check_branch
        %2387 = sbr.rel (%p2385) target = $region104
      $region103: #{tpu_custom_call.1} parent=5 // pred_region
        %s2388 = ssub.s32 %s27, 2
        // Predicated region
        $region105: #{tpu_custom_call.1} parent=103 // pred_check
          %p2389 = pneg %p301
        $region106: #{tpu_custom_call.1} parent=103 // pred_check_branch
          %2391 = sbr.rel (%p2389) target = $region108
        $region107: #{tpu_custom_call.1} parent=103 // pred_region
          %s2392 = sand.u32 %s286, 1
          %s2393 = scalar_lea.sflag [#allocation5], %s2392
          %s2394 = sand.u32 %s286, 1
          %s2395 = smul.addr %s2394, 8
          %s2396 = scalar_lea.vmem [#allocation15], %s2395
          %2398 = dma.done %s2393, 128
        $region108: #{tpu_custom_call.1} parent=103 // pred_fallthru
          _
      $region104: #{tpu_custom_call.1} parent=5 // pred_fallthru
        _
    $region6: #{tpu_custom_call.1} parent=1 // loop_footer
      %s31 = sadd.s32 1, %s27
    $region7: #{tpu_custom_call.1} parent=1 // loop_footer_branch
      %26 = sbr.rel target = $region3
    $region8: #{tpu_custom_call.1} parent=1 // loop_exit
      _
    %2399 = vsyncpa [#allocation4], 1
    %s2400 = scalar_lea.sflag [#allocation4], 1
    %2401 = vsyncpa %s2400, 1
    %2402 = vsyncpa [#allocation7], 1
    %s2403 = scalar_lea.sflag [#allocation7], 1
    %2404 = vsyncpa %s2403, 1
    %2405 = vsyncpa [#allocation10], 1
    %2406 = vsyncpa [#allocation13], 1
    %2407 = vsyncpa [#allocation5], 1
    %s2408 = scalar_lea.sflag [#allocation5], 1
    %2409 = vsyncpa %s2408, 1

</llo_original>
